<compile_context>
chip_gen: v7x
topology: tpu7x:2x2x1
jax: 0.10.0
libtpu: 0.0.40
codegen_flags: <defaults>
</compile_context>

<pallas_src>
import functools

import numpy as np
import jax
import jax.numpy as jnp
from jax.experimental import pallas as pl
from jax.experimental.pallas import tpu as pltpu


def cbam_kernel(x_ref, w1t_ref, w2t_ref, wm_ref, bc_ref, out_ref, *, H, W):
    """One (Bt, C, H*W) block per grid step.

    x_ref  : (Bt, C, HW)    VMEM  input, spatial dims flattened (lane-dense)
    w1t_ref: (C, Cr)        VMEM  1x1-conv weight, pre-transposed
    w2t_ref: (Cr, C)        VMEM  1x1-conv weight, pre-transposed
    wm_ref : (49, 2*Bt, HW) VMEM  per-tap conv-weight * border-validity mask
    bc_ref : (1,)           SMEM  spatial conv bias
    out_ref: (Bt, C, HW)    VMEM  output
    """
    Bt, C, HW = x_ref.shape
    xf = x_ref[...].astype(jnp.float32)                      # (Bt, C, HW)

    # -------- channel attention: single fused shared-MLP pass --------------
    avg = jnp.sum(xf, axis=2) * (1.0 / HW)                   # (Bt, C)
    mx = jnp.max(xf, axis=2)                                 # (Bt, C)
    pooled = jnp.concatenate([avg, mx], axis=0)              # (2*Bt, C)
    h = jnp.maximum(
        jnp.dot(pooled, w1t_ref[...], preferred_element_type=jnp.float32), 0.0)
    mlp = jnp.dot(h, w2t_ref[...], preferred_element_type=jnp.float32)
    ca = jax.nn.sigmoid(mlp[:Bt] + mlp[Bt:])                 # (Bt, C)
    out1 = xf * ca[:, :, None]                               # (Bt, C, HW)

    # -------- spatial attention: 49-tap shift-and-accumulate 7x7 conv ------
    avgmap = jnp.sum(out1, axis=1) * (1.0 / C)               # (Bt, HW)
    maxmap = jnp.max(out1, axis=1)                           # (Bt, HW)
    # Stack the two maps along the sublane axis: one roll per tap and full
    # 8-sublane vreg tiles when Bt >= 4.
    stacked = jnp.concatenate([avgmap, maxmap], axis=0)      # (2*Bt, HW)

    # Fully unrolled shift-and-accumulate. Each tap = one lane roll (XLU) plus
    # one multiply-add against the precomputed weighted mask (VPU).  Four
    # independent accumulators expose ILP to the 4 VALU slots.
    accs = [jnp.zeros((2 * Bt, HW), jnp.float32) for _ in range(4)]
    for tap in range(49):
        ki, kj = tap // 7, tap % 7
        d = (ki - 3) * W + (kj - 3)
        shift = (-d) % HW
        src = stacked if shift == 0 else pltpu.roll(stacked, shift=shift, axis=1)
        accs[tap % 4] = accs[tap % 4] + src * wm_ref[tap]

    conv = (accs[0] + accs[1]) + (accs[2] + accs[3])          # (2*Bt, HW)
    sa = jax.nn.sigmoid(conv[:Bt] + conv[Bt:] + bc_ref[0])    # (Bt, HW)

    out_ref[...] = (out1 * sa[:, None, :]).astype(out_ref.dtype)


def _border_mask_table(H, W):
    """(49, H*W) table: mask[tap=ki*7+kj, p] = 1 iff the 7x7 tap (ki, kj) at
    output position p reads an in-bounds input pixel (stride 1, padding 3)."""
    HW = H * W
    r = np.arange(H)[:, None]
    c = np.arange(W)[None, :]
    mask = np.zeros((49, HW), np.float32)
    for ki in range(7):
        for kj in range(7):
            di, dj = ki - 3, kj - 3
            valid = (r + di >= 0) & (r + di < H) & (c + dj >= 0) & (c + dj < W)
            mask[ki * 7 + kj] = valid.reshape(HW).astype(np.float32)
    return mask


def _vmem_budgets():
    """Generation-aware per-step tile budget and compiler VMEM limit."""
    try:
        cap = int(pltpu.get_tpu_info().vmem_capacity_bytes)
    except Exception:
        cap = 64 << 20                     # conservative default (v7x per-TC)
    tile_budget = max(8 << 20, int(cap * 0.45))
    vmem_limit = max(32 << 20, min(int(cap * 0.75), 100 << 20))
    return tile_budget, vmem_limit


def _pick_batch_tile(B, C, HW, itemsize, tile_budget_bytes):
    """Largest batch tile whose per-step footprint (double-buffered in/out
    blocks + f32 intermediates + weighted-mask table) fits the budget.
    Fewer, fatter steps: only split into >= 2 grid steps (v7x megacore) when
    every step still fills the 8-sublane tile of the stacked (2*Bt, HW) maps."""
    per_image = (4 * C * HW * itemsize      # in + out blocks, double-buffered
                 + 2 * C * HW * 4           # xf + out1 (f32 intermediates)
                 + 16 * HW * 4              # pooled maps + accumulators
                 + 49 * 2 * HW * 4)         # weighted-mask table rows
    bt = max(1, min(B, tile_budget_bytes // max(1, per_image)))
    if bt == B and B >= 8:
        bt = B // 2                          # >=2 steps, each with 2*bt >= 8
    while B % bt:
        bt -= 1
    return max(1, bt)


@jax.jit
def cbam_pallas(x, w1, w2, wc, bc):
    """CBAM forward.  x: (B, C, H, W); w1: (Cr, C); w2: (C, Cr);
    wc: (1, 2, 7, 7); bc: (1,)."""
    B, C, H, W = x.shape
    HW = H * W
    Cr = w1.shape[0]
    tile_budget, vmem_limit = _vmem_budgets()
    bt = _pick_batch_tile(B, C, HW, x.dtype.itemsize, tile_budget)

    # Lane-dense layout: flatten the spatial dims so the last axis is H*W.
    # TODO(synk): for general H*W not a multiple of 128, pad the lane axis to
    # the next multiple of 128 (with max-pool-safe padding) to keep the final
    # store unmasked; not needed for the shapes exercised here.
    x_flat = x.reshape(B, C, HW)
    w1t = jnp.transpose(w1)                  # (C, Cr)
    w2t = jnp.transpose(w2)                  # (Cr, C)

    # Precomputed weighted border-mask table:
    #   wm_full[tap, ch*bt + b, p] = wc[0, ch, ki, kj] * border_mask[ki, kj, p]
    # replicated over the batch tile so the kernel does a single vreg-aligned
    # multiply per tap (no in-kernel mask math, no SMEM scalar weight reads).
    mask = jnp.asarray(_border_mask_table(H, W))              # (49, HW)
    wc_taps = wc.reshape(2, 49).astype(jnp.float32)           # (ch, tap)
    wm = wc_taps.T[:, :, None] * mask[:, None, :]             # (49, 2, HW)
    wm_full = jnp.broadcast_to(
        wm[:, :, None, :], (49, 2, bt, HW)).reshape(49, 2 * bt, HW)

    grid_spec = pltpu.PrefetchScalarGridSpec(
        num_scalar_prefetch=0,
        grid=(B // bt,),
        in_specs=[
            pl.BlockSpec((bt, C, HW), lambda b: (b, 0, 0)),
            pl.BlockSpec((C, Cr), lambda b: (0, 0)),
            pl.BlockSpec((Cr, C), lambda b: (0, 0)),
            pl.BlockSpec((49, 2 * bt, HW), lambda b: (0, 0, 0)),
            pl.BlockSpec(memory_space=pltpu.MemorySpace.SMEM),
        ],
        out_specs=pl.BlockSpec((bt, C, HW), lambda b: (b, 0, 0)),
    )
    out_flat = pl.pallas_call(
        functools.partial(cbam_kernel, H=H, W=W),
        out_shape=jax.ShapeDtypeStruct((B, C, HW), x.dtype),
        grid_spec=grid_spec,
        compiler_params=pltpu.CompilerParams(
            dimension_semantics=("parallel",),
            vmem_limit_bytes=vmem_limit,
        ),
    )(x_flat, w1t, w2t, wm_full, bc)
    return out_flat.reshape(B, C, H, W)


def cbam_reference(x, w1, w2, wc, bc):
    """Pure-JAX reference matching the PyTorch CBAM forward."""
    avg = x.mean(axis=(2, 3))  # (B, C)
    mx = x.max(axis=(2, 3))    # (B, C)

    def mlp(v):
        h = jax.nn.relu(v @ w1.T)  # (B, Cr)
        return h @ w2.T            # (B, C)

    ca = jax.nn.sigmoid(mlp(avg) + mlp(mx))          # (B, C)
    out1 = x * ca[:, :, None, None]                  # (B, C, H, W)

    avgm = out1.mean(axis=1, keepdims=True)          # (B, 1, H, W)
    maxm = out1.max(axis=1, keepdims=True)           # (B, 1, H, W)
    sin = jnp.concatenate([avgm, maxm], axis=1)      # (B, 2, H, W)
    conv = jax.lax.conv_general_dilated(
        sin, wc, window_strides=(1, 1), padding=((3, 3), (3, 3)),
        dimension_numbers=("NCHW", "OIHW", "NCHW")) + bc.reshape(1, 1, 1, 1)
    sa = jax.nn.sigmoid(conv)                        # (B, 1, H, W)
    return out1 * sa


if __name__ == "__main__":
    B, C, H, W = 4, 32, 16, 16
    ratio = 16
    Cr = C // ratio  # 2

    key = jax.random.PRNGKey(0)
    kx, k1, k2, k3, k4 = jax.random.split(key, 5)

    x = jax.random.normal(kx, (B, C, H, W), dtype=jnp.float32)
    # shared MLP: Conv2d(C, C//r, 1, bias=False) and Conv2d(C//r, C, 1, bias=False)
    w1 = jax.random.normal(k1, (Cr, C), dtype=jnp.float32) * 0.1
    w2 = jax.random.normal(k2, (C, Cr), dtype=jnp.float32) * 0.1
    # spatial conv: Conv2d(2, 1, kernel_size=7, padding=3) with bias
    wc = jax.random.normal(k3, (1, 2, 7, 7), dtype=jnp.float32) * 0.1
    bc = jax.random.normal(k4, (1,), dtype=jnp.float32) * 0.1

    out = cbam_pallas(x, w1, w2, wc, bc)
    out = jax.block_until_ready(out)

    ref = cbam_reference(x, w1, w2, wc, bc)
    assert out.shape == (B, C, H, W)
    err = float(jnp.max(jnp.abs(out - ref)))
    assert jnp.allclose(out, ref, atol=2e-4, rtol=2e-4), f"max abs err {err}"

    print("KERNEL_OK")
</pallas_src>

<mosaic_0001>
module attributes {stable_mosaic.version = 11 : i64} {
  func.func @cbam_kernel(%arg0: i32, %arg1: memref<4x32x256xf32, #tpu.memory_space<vmem>>, %arg2: memref<32x2xf32, #tpu.memory_space<vmem>>, %arg3: memref<2x32xf32, #tpu.memory_space<vmem>>, %arg4: memref<49x8x256xf32, #tpu.memory_space<vmem>>, %arg5: memref<1xf32, #tpu.memory_space<smem>>, %arg6: memref<4x32x256xf32, #tpu.memory_space<vmem>>) attributes {dimension_semantics = [#tpu.dimension_semantics<parallel>], iteration_bounds = array<i64: 1>, scalar_prefetch = 0 : i64, scratch_operands = 0 : i64, tpu.core_type = #tpu.core_type<tc>, window_params = [{transform_indices = @transform_0, window_bounds = array<i64: 4, 32, 256>}, {pipeline_mode = #tpu.pipeline_mode<synchronous>, transform_indices = @transform_1, window_bounds = array<i64: 32, 2>}, {pipeline_mode = #tpu.pipeline_mode<synchronous>, transform_indices = @transform_2, window_bounds = array<i64: 2, 32>}, {pipeline_mode = #tpu.pipeline_mode<synchronous>, transform_indices = @transform_3, window_bounds = array<i64: 49, 8, 256>}, {transform_indices = @transform_4, window_bounds = array<i64: 1>}, {transform_indices = @transform_5, window_bounds = array<i64: 4, 32, 256>}]} {
    %c0 = arith.constant 0 : index
    %c0_0 = arith.constant 0 : index
    %c0_1 = arith.constant 0 : index
    %0 = vector.load %arg1[%c0, %c0_0, %c0_1] : memref<4x32x256xf32, #tpu.memory_space<vmem>>, vector<4x32x256xf32>
    %cst = arith.constant dense<0.000000e+00> : vector<4x32xf32>
    %1 = vector.multi_reduction <add>, %0, %cst [2] : vector<4x32x256xf32> to vector<4x32xf32>
    %cst_2 = arith.constant 3.906250e-03 : f32
    %2 = vector.broadcast %cst_2 : f32 to vector<4x32xf32>
    %3 = arith.mulf %1, %2 : vector<4x32xf32>
    %cst_3 = arith.constant dense<0xFF800000> : vector<4x32xf32>
    %4 = vector.multi_reduction <maximumf>, %0, %cst_3 [2] : vector<4x32x256xf32> to vector<4x32xf32>
    %5 = tpu.concatenate %3, %4 in 0 : vector<4x32xf32>, vector<4x32xf32> -> vector<8x32xf32>
    %c0_4 = arith.constant 0 : index
    %c0_5 = arith.constant 0 : index
    %6 = vector.load %arg2[%c0_4, %c0_5] : memref<32x2xf32, #tpu.memory_space<vmem>>, vector<32x2xf32>
    %cst_6 = arith.constant dense<0.000000e+00> : vector<8x2xf32>
    %7 = tpu.matmul %5, %6, %cst_6 {dimension_numbers = #tpu.dot_dimension_numbers<[1], [0], [0], [1], [0, 0, 1, 1], [], []>} : vector<8x32xf32>, vector<32x2xf32>, vector<8x2xf32> -> vector<8x2xf32>
    %cst_7 = arith.constant 0.000000e+00 : f32
    %8 = vector.broadcast %cst_7 : f32 to vector<8x2xf32>
    %9 = arith.maximumf %7, %8 : vector<8x2xf32>
    %c0_8 = arith.constant 0 : index
    %c0_9 = arith.constant 0 : index
    %10 = vector.load %arg3[%c0_8, %c0_9] : memref<2x32xf32, #tpu.memory_space<vmem>>, vector<2x32xf32>
    %cst_10 = arith.constant dense<0.000000e+00> : vector<8x32xf32>
    %11 = tpu.matmul %9, %10, %cst_10 {dimension_numbers = #tpu.dot_dimension_numbers<[1], [0], [0], [1], [0, 0, 1, 1], [], []>} : vector<8x2xf32>, vector<2x32xf32>, vector<8x32xf32> -> vector<8x32xf32>
    %12 = vector.extract_strided_slice %11 {offsets = [0, 0], sizes = [4, 32], strides = [1, 1]} : vector<8x32xf32> to vector<4x32xf32>
    %13 = vector.extract_strided_slice %11 {offsets = [4, 0], sizes = [4, 32], strides = [1, 1]} : vector<8x32xf32> to vector<4x32xf32>
    %14 = arith.addf %12, %13 : vector<4x32xf32>
    %15 = arith.negf %14 : vector<4x32xf32>
    %16 = math.exp %15 : vector<4x32xf32>
    %cst_11 = arith.constant 1.000000e+00 : f32
    %17 = vector.broadcast %cst_11 : f32 to vector<4x32xf32>
    %18 = arith.addf %17, %16 : vector<4x32xf32>
    %19 = arith.divf %17, %18 : vector<4x32xf32>
    %20 = vector.shape_cast %19 : vector<4x32xf32> to vector<4x32x1xf32>
    %21 = vector.broadcast %20 : vector<4x32x1xf32> to vector<4x32x256xf32>
    %22 = arith.mulf %0, %21 : vector<4x32x256xf32>
    %cst_12 = arith.constant dense<0.000000e+00> : vector<4x256xf32>
    %23 = vector.multi_reduction <add>, %22, %cst_12 [1] : vector<4x32x256xf32> to vector<4x256xf32>
    %cst_13 = arith.constant 3.125000e-02 : f32
    %24 = vector.broadcast %cst_13 : f32 to vector<4x256xf32>
    %25 = arith.mulf %23, %24 : vector<4x256xf32>
    %cst_14 = arith.constant dense<0xFF800000> : vector<4x256xf32>
    %26 = vector.multi_reduction <maximumf>, %22, %cst_14 [1] : vector<4x32x256xf32> to vector<4x256xf32>
    %27 = tpu.concatenate %25, %26 in 0 : vector<4x256xf32>, vector<4x256xf32> -> vector<8x256xf32>
    %cst_15 = arith.constant 0.000000e+00 : f32
    %28 = vector.broadcast %cst_15 : f32 to vector<8x256xf32>
    %cst_16 = arith.constant 0.000000e+00 : f32
    %29 = vector.broadcast %cst_16 : f32 to vector<8x256xf32>
    %cst_17 = arith.constant 0.000000e+00 : f32
    %30 = vector.broadcast %cst_17 : f32 to vector<8x256xf32>
    %cst_18 = arith.constant 0.000000e+00 : f32
    %31 = vector.broadcast %cst_18 : f32 to vector<8x256xf32>
    %c51_i32 = arith.constant 51 : i32
    %32 = tpu.dynamic_rotate %27 by %c51_i32 dim 1 : vector<8x256xf32>, i32 -> vector<8x256xf32>
    %c0_19 = arith.constant 0 : index
    %c0_20 = arith.constant 0 : index
    %c0_21 = arith.constant 0 : index
    %33 = vector.load %arg4[%c0_19, %c0_20, %c0_21] : memref<49x8x256xf32, #tpu.memory_space<vmem>>, vector<1x8x256xf32>
    %34 = vector.shape_cast %33 : vector<1x8x256xf32> to vector<8x256xf32>
    %35 = arith.mulf %32, %34 : vector<8x256xf32>
    %36 = arith.addf %28, %35 : vector<8x256xf32>
    %c50_i32 = arith.constant 50 : i32
    %37 = tpu.dynamic_rotate %27 by %c50_i32 dim 1 : vector<8x256xf32>, i32 -> vector<8x256xf32>
    %c1 = arith.constant 1 : index
    %c0_22 = arith.constant 0 : index
    %c0_23 = arith.constant 0 : index
    %38 = vector.load %arg4[%c1, %c0_22, %c0_23] : memref<49x8x256xf32, #tpu.memory_space<vmem>>, vector<1x8x256xf32>
    %39 = vector.shape_cast %38 : vector<1x8x256xf32> to vector<8x256xf32>
    %40 = arith.mulf %37, %39 : vector<8x256xf32>
    %41 = arith.addf %29, %40 : vector<8x256xf32>
    %c49_i32 = arith.constant 49 : i32
    %42 = tpu.dynamic_rotate %27 by %c49_i32 dim 1 : vector<8x256xf32>, i32 -> vector<8x256xf32>
    %c2 = arith.constant 2 : index
    %c0_24 = arith.constant 0 : index
    %c0_25 = arith.constant 0 : index
    %43 = vector.load %arg4[%c2, %c0_24, %c0_25] : memref<49x8x256xf32, #tpu.memory_space<vmem>>, vector<1x8x256xf32>
    %44 = vector.shape_cast %43 : vector<1x8x256xf32> to vector<8x256xf32>
    %45 = arith.mulf %42, %44 : vector<8x256xf32>
    %46 = arith.addf %30, %45 : vector<8x256xf32>
    %c48_i32 = arith.constant 48 : i32
    %47 = tpu.dynamic_rotate %27 by %c48_i32 dim 1 : vector<8x256xf32>, i32 -> vector<8x256xf32>
    %c3 = arith.constant 3 : index
    %c0_26 = arith.constant 0 : index
    %c0_27 = arith.constant 0 : index
    %48 = vector.load %arg4[%c3, %c0_26, %c0_27] : memref<49x8x256xf32, #tpu.memory_space<vmem>>, vector<1x8x256xf32>
    %49 = vector.shape_cast %48 : vector<1x8x256xf32> to vector<8x256xf32>
    %50 = arith.mulf %47, %49 : vector<8x256xf32>
    %51 = arith.addf %31, %50 : vector<8x256xf32>
    %c47_i32 = arith.constant 47 : i32
    %52 = tpu.dynamic_rotate %27 by %c47_i32 dim 1 : vector<8x256xf32>, i32 -> vector<8x256xf32>
    %c4 = arith.constant 4 : index
    %c0_28 = arith.constant 0 : index
    %c0_29 = arith.constant 0 : index
    %53 = vector.load %arg4[%c4, %c0_28, %c0_29] : memref<49x8x256xf32, #tpu.memory_space<vmem>>, vector<1x8x256xf32>
    %54 = vector.shape_cast %53 : vector<1x8x256xf32> to vector<8x256xf32>
    %55 = arith.mulf %52, %54 : vector<8x256xf32>
    %56 = arith.addf %36, %55 : vector<8x256xf32>
    %c46_i32 = arith.constant 46 : i32
    %57 = tpu.dynamic_rotate %27 by %c46_i32 dim 1 : vector<8x256xf32>, i32 -> vector<8x256xf32>
    %c5 = arith.constant 5 : index
    %c0_30 = arith.constant 0 : index
    %c0_31 = arith.constant 0 : index
    %58 = vector.load %arg4[%c5, %c0_30, %c0_31] : memref<49x8x256xf32, #tpu.memory_space<vmem>>, vector<1x8x256xf32>
    %59 = vector.shape_cast %58 : vector<1x8x256xf32> to vector<8x256xf32>
    %60 = arith.mulf %57, %59 : vector<8x256xf32>
    %61 = arith.addf %41, %60 : vector<8x256xf32>
    %c45_i32 = arith.constant 45 : i32
    %62 = tpu.dynamic_rotate %27 by %c45_i32 dim 1 : vector<8x256xf32>, i32 -> vector<8x256xf32>
    %c6 = arith.constant 6 : index
    %c0_32 = arith.constant 0 : index
    %c0_33 = arith.constant 0 : index
    %63 = vector.load %arg4[%c6, %c0_32, %c0_33] : memref<49x8x256xf32, #tpu.memory_space<vmem>>, vector<1x8x256xf32>
    %64 = vector.shape_cast %63 : vector<1x8x256xf32> to vector<8x256xf32>
    %65 = arith.mulf %62, %64 : vector<8x256xf32>
    %66 = arith.addf %46, %65 : vector<8x256xf32>
    %c35_i32 = arith.constant 35 : i32
    %67 = tpu.dynamic_rotate %27 by %c35_i32 dim 1 : vector<8x256xf32>, i32 -> vector<8x256xf32>
    %c7 = arith.constant 7 : index
    %c0_34 = arith.constant 0 : index
    %c0_35 = arith.constant 0 : index
    %68 = vector.load %arg4[%c7, %c0_34, %c0_35] : memref<49x8x256xf32, #tpu.memory_space<vmem>>, vector<1x8x256xf32>
    %69 = vector.shape_cast %68 : vector<1x8x256xf32> to vector<8x256xf32>
    %70 = arith.mulf %67, %69 : vector<8x256xf32>
    %71 = arith.addf %51, %70 : vector<8x256xf32>
    %c34_i32 = arith.constant 34 : i32
    %72 = tpu.dynamic_rotate %27 by %c34_i32 dim 1 : vector<8x256xf32>, i32 -> vector<8x256xf32>
    %c8 = arith.constant 8 : index
    %c0_36 = arith.constant 0 : index
    %c0_37 = arith.constant 0 : index
    %73 = vector.load %arg4[%c8, %c0_36, %c0_37] : memref<49x8x256xf32, #tpu.memory_space<vmem>>, vector<1x8x256xf32>
    %74 = vector.shape_cast %73 : vector<1x8x256xf32> to vector<8x256xf32>
    %75 = arith.mulf %72, %74 : vector<8x256xf32>
    %76 = arith.addf %56, %75 : vector<8x256xf32>
    %c33_i32 = arith.constant 33 : i32
    %77 = tpu.dynamic_rotate %27 by %c33_i32 dim 1 : vector<8x256xf32>, i32 -> vector<8x256xf32>
    %c9 = arith.constant 9 : index
    %c0_38 = arith.constant 0 : index
    %c0_39 = arith.constant 0 : index
    %78 = vector.load %arg4[%c9, %c0_38, %c0_39] : memref<49x8x256xf32, #tpu.memory_space<vmem>>, vector<1x8x256xf32>
    %79 = vector.shape_cast %78 : vector<1x8x256xf32> to vector<8x256xf32>
    %80 = arith.mulf %77, %79 : vector<8x256xf32>
    %81 = arith.addf %61, %80 : vector<8x256xf32>
    %c32_i32 = arith.constant 32 : i32
    %82 = tpu.dynamic_rotate %27 by %c32_i32 dim 1 : vector<8x256xf32>, i32 -> vector<8x256xf32>
    %c10 = arith.constant 10 : index
    %c0_40 = arith.constant 0 : index
    %c0_41 = arith.constant 0 : index
    %83 = vector.load %arg4[%c10, %c0_40, %c0_41] : memref<49x8x256xf32, #tpu.memory_space<vmem>>, vector<1x8x256xf32>
    %84 = vector.shape_cast %83 : vector<1x8x256xf32> to vector<8x256xf32>
    %85 = arith.mulf %82, %84 : vector<8x256xf32>
    %86 = arith.addf %66, %85 : vector<8x256xf32>
    %c31_i32 = arith.constant 31 : i32
    %87 = tpu.dynamic_rotate %27 by %c31_i32 dim 1 : vector<8x256xf32>, i32 -> vector<8x256xf32>
    %c11 = arith.constant 11 : index
    %c0_42 = arith.constant 0 : index
    %c0_43 = arith.constant 0 : index
    %88 = vector.load %arg4[%c11, %c0_42, %c0_43] : memref<49x8x256xf32, #tpu.memory_space<vmem>>, vector<1x8x256xf32>
    %89 = vector.shape_cast %88 : vector<1x8x256xf32> to vector<8x256xf32>
    %90 = arith.mulf %87, %89 : vector<8x256xf32>
    %91 = arith.addf %71, %90 : vector<8x256xf32>
    %c30_i32 = arith.constant 30 : i32
    %92 = tpu.dynamic_rotate %27 by %c30_i32 dim 1 : vector<8x256xf32>, i32 -> vector<8x256xf32>
    %c12 = arith.constant 12 : index
    %c0_44 = arith.constant 0 : index
    %c0_45 = arith.constant 0 : index
    %93 = vector.load %arg4[%c12, %c0_44, %c0_45] : memref<49x8x256xf32, #tpu.memory_space<vmem>>, vector<1x8x256xf32>
    %94 = vector.shape_cast %93 : vector<1x8x256xf32> to vector<8x256xf32>
    %95 = arith.mulf %92, %94 : vector<8x256xf32>
    %96 = arith.addf %76, %95 : vector<8x256xf32>
    %c29_i32 = arith.constant 29 : i32
    %97 = tpu.dynamic_rotate %27 by %c29_i32 dim 1 : vector<8x256xf32>, i32 -> vector<8x256xf32>
    %c13 = arith.constant 13 : index
    %c0_46 = arith.constant 0 : index
    %c0_47 = arith.constant 0 : index
    %98 = vector.load %arg4[%c13, %c0_46, %c0_47] : memref<49x8x256xf32, #tpu.memory_space<vmem>>, vector<1x8x256xf32>
    %99 = vector.shape_cast %98 : vector<1x8x256xf32> to vector<8x256xf32>
    %100 = arith.mulf %97, %99 : vector<8x256xf32>
    %101 = arith.addf %81, %100 : vector<8x256xf32>
    %c19_i32 = arith.constant 19 : i32
    %102 = tpu.dynamic_rotate %27 by %c19_i32 dim 1 : vector<8x256xf32>, i32 -> vector<8x256xf32>
    %c14 = arith.constant 14 : index
    %c0_48 = arith.constant 0 : index
    %c0_49 = arith.constant 0 : index
    %103 = vector.load %arg4[%c14, %c0_48, %c0_49] : memref<49x8x256xf32, #tpu.memory_space<vmem>>, vector<1x8x256xf32>
    %104 = vector.shape_cast %103 : vector<1x8x256xf32> to vector<8x256xf32>
    %105 = arith.mulf %102, %104 : vector<8x256xf32>
    %106 = arith.addf %86, %105 : vector<8x256xf32>
    %c18_i32 = arith.constant 18 : i32
    %107 = tpu.dynamic_rotate %27 by %c18_i32 dim 1 : vector<8x256xf32>, i32 -> vector<8x256xf32>
    %c15 = arith.constant 15 : index
    %c0_50 = arith.constant 0 : index
    %c0_51 = arith.constant 0 : index
    %108 = vector.load %arg4[%c15, %c0_50, %c0_51] : memref<49x8x256xf32, #tpu.memory_space<vmem>>, vector<1x8x256xf32>
    %109 = vector.shape_cast %108 : vector<1x8x256xf32> to vector<8x256xf32>
    %110 = arith.mulf %107, %109 : vector<8x256xf32>
    %111 = arith.addf %91, %110 : vector<8x256xf32>
    %c17_i32 = arith.constant 17 : i32
    %112 = tpu.dynamic_rotate %27 by %c17_i32 dim 1 : vector<8x256xf32>, i32 -> vector<8x256xf32>
    %c16 = arith.constant 16 : index
    %c0_52 = arith.constant 0 : index
    %c0_53 = arith.constant 0 : index
    %113 = vector.load %arg4[%c16, %c0_52, %c0_53] : memref<49x8x256xf32, #tpu.memory_space<vmem>>, vector<1x8x256xf32>
    %114 = vector.shape_cast %113 : vector<1x8x256xf32> to vector<8x256xf32>
    %115 = arith.mulf %112, %114 : vector<8x256xf32>
    %116 = arith.addf %96, %115 : vector<8x256xf32>
    %c16_i32 = arith.constant 16 : i32
    %117 = tpu.dynamic_rotate %27 by %c16_i32 dim 1 : vector<8x256xf32>, i32 -> vector<8x256xf32>
    %c17 = arith.constant 17 : index
    %c0_54 = arith.constant 0 : index
    %c0_55 = arith.constant 0 : index
    %118 = vector.load %arg4[%c17, %c0_54, %c0_55] : memref<49x8x256xf32, #tpu.memory_space<vmem>>, vector<1x8x256xf32>
    %119 = vector.shape_cast %118 : vector<1x8x256xf32> to vector<8x256xf32>
    %120 = arith.mulf %117, %119 : vector<8x256xf32>
    %121 = arith.addf %101, %120 : vector<8x256xf32>
    %c15_i32 = arith.constant 15 : i32
    %122 = tpu.dynamic_rotate %27 by %c15_i32 dim 1 : vector<8x256xf32>, i32 -> vector<8x256xf32>
    %c18 = arith.constant 18 : index
    %c0_56 = arith.constant 0 : index
    %c0_57 = arith.constant 0 : index
    %123 = vector.load %arg4[%c18, %c0_56, %c0_57] : memref<49x8x256xf32, #tpu.memory_space<vmem>>, vector<1x8x256xf32>
    %124 = vector.shape_cast %123 : vector<1x8x256xf32> to vector<8x256xf32>
    %125 = arith.mulf %122, %124 : vector<8x256xf32>
    %126 = arith.addf %106, %125 : vector<8x256xf32>
    %c14_i32 = arith.constant 14 : i32
    %127 = tpu.dynamic_rotate %27 by %c14_i32 dim 1 : vector<8x256xf32>, i32 -> vector<8x256xf32>
    %c19 = arith.constant 19 : index
    %c0_58 = arith.constant 0 : index
    %c0_59 = arith.constant 0 : index
    %128 = vector.load %arg4[%c19, %c0_58, %c0_59] : memref<49x8x256xf32, #tpu.memory_space<vmem>>, vector<1x8x256xf32>
    %129 = vector.shape_cast %128 : vector<1x8x256xf32> to vector<8x256xf32>
    %130 = arith.mulf %127, %129 : vector<8x256xf32>
    %131 = arith.addf %111, %130 : vector<8x256xf32>
    %c13_i32 = arith.constant 13 : i32
    %132 = tpu.dynamic_rotate %27 by %c13_i32 dim 1 : vector<8x256xf32>, i32 -> vector<8x256xf32>
    %c20 = arith.constant 20 : index
    %c0_60 = arith.constant 0 : index
    %c0_61 = arith.constant 0 : index
    %133 = vector.load %arg4[%c20, %c0_60, %c0_61] : memref<49x8x256xf32, #tpu.memory_space<vmem>>, vector<1x8x256xf32>
    %134 = vector.shape_cast %133 : vector<1x8x256xf32> to vector<8x256xf32>
    %135 = arith.mulf %132, %134 : vector<8x256xf32>
    %136 = arith.addf %116, %135 : vector<8x256xf32>
    %c3_i32 = arith.constant 3 : i32
    %137 = tpu.dynamic_rotate %27 by %c3_i32 dim 1 : vector<8x256xf32>, i32 -> vector<8x256xf32>
    %c21 = arith.constant 21 : index
    %c0_62 = arith.constant 0 : index
    %c0_63 = arith.constant 0 : index
    %138 = vector.load %arg4[%c21, %c0_62, %c0_63] : memref<49x8x256xf32, #tpu.memory_space<vmem>>, vector<1x8x256xf32>
    %139 = vector.shape_cast %138 : vector<1x8x256xf32> to vector<8x256xf32>
    %140 = arith.mulf %137, %139 : vector<8x256xf32>
    %141 = arith.addf %121, %140 : vector<8x256xf32>
    %c2_i32 = arith.constant 2 : i32
    %142 = tpu.dynamic_rotate %27 by %c2_i32 dim 1 : vector<8x256xf32>, i32 -> vector<8x256xf32>
    %c22 = arith.constant 22 : index
    %c0_64 = arith.constant 0 : index
    %c0_65 = arith.constant 0 : index
    %143 = vector.load %arg4[%c22, %c0_64, %c0_65] : memref<49x8x256xf32, #tpu.memory_space<vmem>>, vector<1x8x256xf32>
    %144 = vector.shape_cast %143 : vector<1x8x256xf32> to vector<8x256xf32>
    %145 = arith.mulf %142, %144 : vector<8x256xf32>
    %146 = arith.addf %126, %145 : vector<8x256xf32>
    %c1_i32 = arith.constant 1 : i32
    %147 = tpu.dynamic_rotate %27 by %c1_i32 dim 1 : vector<8x256xf32>, i32 -> vector<8x256xf32>
    %c23 = arith.constant 23 : index
    %c0_66 = arith.constant 0 : index
    %c0_67 = arith.constant 0 : index
    %148 = vector.load %arg4[%c23, %c0_66, %c0_67] : memref<49x8x256xf32, #tpu.memory_space<vmem>>, vector<1x8x256xf32>
    %149 = vector.shape_cast %148 : vector<1x8x256xf32> to vector<8x256xf32>
    %150 = arith.mulf %147, %149 : vector<8x256xf32>
    %151 = arith.addf %131, %150 : vector<8x256xf32>
    %c24 = arith.constant 24 : index
    %c0_68 = arith.constant 0 : index
    %c0_69 = arith.constant 0 : index
    %152 = vector.load %arg4[%c24, %c0_68, %c0_69] : memref<49x8x256xf32, #tpu.memory_space<vmem>>, vector<1x8x256xf32>
    %153 = vector.shape_cast %152 : vector<1x8x256xf32> to vector<8x256xf32>
    %154 = arith.mulf %27, %153 : vector<8x256xf32>
    %155 = arith.addf %136, %154 : vector<8x256xf32>
    %c255_i32 = arith.constant 255 : i32
    %156 = tpu.dynamic_rotate %27 by %c255_i32 dim 1 : vector<8x256xf32>, i32 -> vector<8x256xf32>
    %c25 = arith.constant 25 : index
    %c0_70 = arith.constant 0 : index
    %c0_71 = arith.constant 0 : index
    %157 = vector.load %arg4[%c25, %c0_70, %c0_71] : memref<49x8x256xf32, #tpu.memory_space<vmem>>, vector<1x8x256xf32>
    %158 = vector.shape_cast %157 : vector<1x8x256xf32> to vector<8x256xf32>
    %159 = arith.mulf %156, %158 : vector<8x256xf32>
    %160 = arith.addf %141, %159 : vector<8x256xf32>
    %c254_i32 = arith.constant 254 : i32
    %161 = tpu.dynamic_rotate %27 by %c254_i32 dim 1 : vector<8x256xf32>, i32 -> vector<8x256xf32>
    %c26 = arith.constant 26 : index
    %c0_72 = arith.constant 0 : index
    %c0_73 = arith.constant 0 : index
    %162 = vector.load %arg4[%c26, %c0_72, %c0_73] : memref<49x8x256xf32, #tpu.memory_space<vmem>>, vector<1x8x256xf32>
    %163 = vector.shape_cast %162 : vector<1x8x256xf32> to vector<8x256xf32>
    %164 = arith.mulf %161, %163 : vector<8x256xf32>
    %165 = arith.addf %146, %164 : vector<8x256xf32>
    %c253_i32 = arith.constant 253 : i32
    %166 = tpu.dynamic_rotate %27 by %c253_i32 dim 1 : vector<8x256xf32>, i32 -> vector<8x256xf32>
    %c27 = arith.constant 27 : index
    %c0_74 = arith.constant 0 : index
    %c0_75 = arith.constant 0 : index
    %167 = vector.load %arg4[%c27, %c0_74, %c0_75] : memref<49x8x256xf32, #tpu.memory_space<vmem>>, vector<1x8x256xf32>
    %168 = vector.shape_cast %167 : vector<1x8x256xf32> to vector<8x256xf32>
    %169 = arith.mulf %166, %168 : vector<8x256xf32>
    %170 = arith.addf %151, %169 : vector<8x256xf32>
    %c243_i32 = arith.constant 243 : i32
    %171 = tpu.dynamic_rotate %27 by %c243_i32 dim 1 : vector<8x256xf32>, i32 -> vector<8x256xf32>
    %c28 = arith.constant 28 : index
    %c0_76 = arith.constant 0 : index
    %c0_77 = arith.constant 0 : index
    %172 = vector.load %arg4[%c28, %c0_76, %c0_77] : memref<49x8x256xf32, #tpu.memory_space<vmem>>, vector<1x8x256xf32>
    %173 = vector.shape_cast %172 : vector<1x8x256xf32> to vector<8x256xf32>
    %174 = arith.mulf %171, %173 : vector<8x256xf32>
    %175 = arith.addf %155, %174 : vector<8x256xf32>
    %c242_i32 = arith.constant 242 : i32
    %176 = tpu.dynamic_rotate %27 by %c242_i32 dim 1 : vector<8x256xf32>, i32 -> vector<8x256xf32>
    %c29 = arith.constant 29 : index
    %c0_78 = arith.constant 0 : index
    %c0_79 = arith.constant 0 : index
    %177 = vector.load %arg4[%c29, %c0_78, %c0_79] : memref<49x8x256xf32, #tpu.memory_space<vmem>>, vector<1x8x256xf32>
    %178 = vector.shape_cast %177 : vector<1x8x256xf32> to vector<8x256xf32>
    %179 = arith.mulf %176, %178 : vector<8x256xf32>
    %180 = arith.addf %160, %179 : vector<8x256xf32>
    %c241_i32 = arith.constant 241 : i32
    %181 = tpu.dynamic_rotate %27 by %c241_i32 dim 1 : vector<8x256xf32>, i32 -> vector<8x256xf32>
    %c30 = arith.constant 30 : index
    %c0_80 = arith.constant 0 : index
    %c0_81 = arith.constant 0 : index
    %182 = vector.load %arg4[%c30, %c0_80, %c0_81] : memref<49x8x256xf32, #tpu.memory_space<vmem>>, vector<1x8x256xf32>
    %183 = vector.shape_cast %182 : vector<1x8x256xf32> to vector<8x256xf32>
    %184 = arith.mulf %181, %183 : vector<8x256xf32>
    %185 = arith.addf %165, %184 : vector<8x256xf32>
    %c240_i32 = arith.constant 240 : i32
    %186 = tpu.dynamic_rotate %27 by %c240_i32 dim 1 : vector<8x256xf32>, i32 -> vector<8x256xf32>
    %c31 = arith.constant 31 : index
    %c0_82 = arith.constant 0 : index
    %c0_83 = arith.constant 0 : index
    %187 = vector.load %arg4[%c31, %c0_82, %c0_83] : memref<49x8x256xf32, #tpu.memory_space<vmem>>, vector<1x8x256xf32>
    %188 = vector.shape_cast %187 : vector<1x8x256xf32> to vector<8x256xf32>
    %189 = arith.mulf %186, %188 : vector<8x256xf32>
    %190 = arith.addf %170, %189 : vector<8x256xf32>
    %c239_i32 = arith.constant 239 : i32
    %191 = tpu.dynamic_rotate %27 by %c239_i32 dim 1 : vector<8x256xf32>, i32 -> vector<8x256xf32>
    %c32 = arith.constant 32 : index
    %c0_84 = arith.constant 0 : index
    %c0_85 = arith.constant 0 : index
    %192 = vector.load %arg4[%c32, %c0_84, %c0_85] : memref<49x8x256xf32, #tpu.memory_space<vmem>>, vector<1x8x256xf32>
    %193 = vector.shape_cast %192 : vector<1x8x256xf32> to vector<8x256xf32>
    %194 = arith.mulf %191, %193 : vector<8x256xf32>
    %195 = arith.addf %175, %194 : vector<8x256xf32>
    %c238_i32 = arith.constant 238 : i32
    %196 = tpu.dynamic_rotate %27 by %c238_i32 dim 1 : vector<8x256xf32>, i32 -> vector<8x256xf32>
    %c33 = arith.constant 33 : index
    %c0_86 = arith.constant 0 : index
    %c0_87 = arith.constant 0 : index
    %197 = vector.load %arg4[%c33, %c0_86, %c0_87] : memref<49x8x256xf32, #tpu.memory_space<vmem>>, vector<1x8x256xf32>
    %198 = vector.shape_cast %197 : vector<1x8x256xf32> to vector<8x256xf32>
    %199 = arith.mulf %196, %198 : vector<8x256xf32>
    %200 = arith.addf %180, %199 : vector<8x256xf32>
    %c237_i32 = arith.constant 237 : i32
    %201 = tpu.dynamic_rotate %27 by %c237_i32 dim 1 : vector<8x256xf32>, i32 -> vector<8x256xf32>
    %c34 = arith.constant 34 : index
    %c0_88 = arith.constant 0 : index
    %c0_89 = arith.constant 0 : index
    %202 = vector.load %arg4[%c34, %c0_88, %c0_89] : memref<49x8x256xf32, #tpu.memory_space<vmem>>, vector<1x8x256xf32>
    %203 = vector.shape_cast %202 : vector<1x8x256xf32> to vector<8x256xf32>
    %204 = arith.mulf %201, %203 : vector<8x256xf32>
    %205 = arith.addf %185, %204 : vector<8x256xf32>
    %c227_i32 = arith.constant 227 : i32
    %206 = tpu.dynamic_rotate %27 by %c227_i32 dim 1 : vector<8x256xf32>, i32 -> vector<8x256xf32>
    %c35 = arith.constant 35 : index
    %c0_90 = arith.constant 0 : index
    %c0_91 = arith.constant 0 : index
    %207 = vector.load %arg4[%c35, %c0_90, %c0_91] : memref<49x8x256xf32, #tpu.memory_space<vmem>>, vector<1x8x256xf32>
    %208 = vector.shape_cast %207 : vector<1x8x256xf32> to vector<8x256xf32>
    %209 = arith.mulf %206, %208 : vector<8x256xf32>
    %210 = arith.addf %190, %209 : vector<8x256xf32>
    %c226_i32 = arith.constant 226 : i32
    %211 = tpu.dynamic_rotate %27 by %c226_i32 dim 1 : vector<8x256xf32>, i32 -> vector<8x256xf32>
    %c36 = arith.constant 36 : index
    %c0_92 = arith.constant 0 : index
    %c0_93 = arith.constant 0 : index
    %212 = vector.load %arg4[%c36, %c0_92, %c0_93] : memref<49x8x256xf32, #tpu.memory_space<vmem>>, vector<1x8x256xf32>
    %213 = vector.shape_cast %212 : vector<1x8x256xf32> to vector<8x256xf32>
    %214 = arith.mulf %211, %213 : vector<8x256xf32>
    %215 = arith.addf %195, %214 : vector<8x256xf32>
    %c225_i32 = arith.constant 225 : i32
    %216 = tpu.dynamic_rotate %27 by %c225_i32 dim 1 : vector<8x256xf32>, i32 -> vector<8x256xf32>
    %c37 = arith.constant 37 : index
    %c0_94 = arith.constant 0 : index
    %c0_95 = arith.constant 0 : index
    %217 = vector.load %arg4[%c37, %c0_94, %c0_95] : memref<49x8x256xf32, #tpu.memory_space<vmem>>, vector<1x8x256xf32>
    %218 = vector.shape_cast %217 : vector<1x8x256xf32> to vector<8x256xf32>
    %219 = arith.mulf %216, %218 : vector<8x256xf32>
    %220 = arith.addf %200, %219 : vector<8x256xf32>
    %c224_i32 = arith.constant 224 : i32
    %221 = tpu.dynamic_rotate %27 by %c224_i32 dim 1 : vector<8x256xf32>, i32 -> vector<8x256xf32>
    %c38 = arith.constant 38 : index
    %c0_96 = arith.constant 0 : index
    %c0_97 = arith.constant 0 : index
    %222 = vector.load %arg4[%c38, %c0_96, %c0_97] : memref<49x8x256xf32, #tpu.memory_space<vmem>>, vector<1x8x256xf32>
    %223 = vector.shape_cast %222 : vector<1x8x256xf32> to vector<8x256xf32>
    %224 = arith.mulf %221, %223 : vector<8x256xf32>
    %225 = arith.addf %205, %224 : vector<8x256xf32>
    %c223_i32 = arith.constant 223 : i32
    %226 = tpu.dynamic_rotate %27 by %c223_i32 dim 1 : vector<8x256xf32>, i32 -> vector<8x256xf32>
    %c39 = arith.constant 39 : index
    %c0_98 = arith.constant 0 : index
    %c0_99 = arith.constant 0 : index
    %227 = vector.load %arg4[%c39, %c0_98, %c0_99] : memref<49x8x256xf32, #tpu.memory_space<vmem>>, vector<1x8x256xf32>
    %228 = vector.shape_cast %227 : vector<1x8x256xf32> to vector<8x256xf32>
    %229 = arith.mulf %226, %228 : vector<8x256xf32>
    %230 = arith.addf %210, %229 : vector<8x256xf32>
    %c222_i32 = arith.constant 222 : i32
    %231 = tpu.dynamic_rotate %27 by %c222_i32 dim 1 : vector<8x256xf32>, i32 -> vector<8x256xf32>
    %c40 = arith.constant 40 : index
    %c0_100 = arith.constant 0 : index
    %c0_101 = arith.constant 0 : index
    %232 = vector.load %arg4[%c40, %c0_100, %c0_101] : memref<49x8x256xf32, #tpu.memory_space<vmem>>, vector<1x8x256xf32>
    %233 = vector.shape_cast %232 : vector<1x8x256xf32> to vector<8x256xf32>
    %234 = arith.mulf %231, %233 : vector<8x256xf32>
    %235 = arith.addf %215, %234 : vector<8x256xf32>
    %c221_i32 = arith.constant 221 : i32
    %236 = tpu.dynamic_rotate %27 by %c221_i32 dim 1 : vector<8x256xf32>, i32 -> vector<8x256xf32>
    %c41 = arith.constant 41 : index
    %c0_102 = arith.constant 0 : index
    %c0_103 = arith.constant 0 : index
    %237 = vector.load %arg4[%c41, %c0_102, %c0_103] : memref<49x8x256xf32, #tpu.memory_space<vmem>>, vector<1x8x256xf32>
    %238 = vector.shape_cast %237 : vector<1x8x256xf32> to vector<8x256xf32>
    %239 = arith.mulf %236, %238 : vector<8x256xf32>
    %240 = arith.addf %220, %239 : vector<8x256xf32>
    %c211_i32 = arith.constant 211 : i32
    %241 = tpu.dynamic_rotate %27 by %c211_i32 dim 1 : vector<8x256xf32>, i32 -> vector<8x256xf32>
    %c42 = arith.constant 42 : index
    %c0_104 = arith.constant 0 : index
    %c0_105 = arith.constant 0 : index
    %242 = vector.load %arg4[%c42, %c0_104, %c0_105] : memref<49x8x256xf32, #tpu.memory_space<vmem>>, vector<1x8x256xf32>
    %243 = vector.shape_cast %242 : vector<1x8x256xf32> to vector<8x256xf32>
    %244 = arith.mulf %241, %243 : vector<8x256xf32>
    %245 = arith.addf %225, %244 : vector<8x256xf32>
    %c210_i32 = arith.constant 210 : i32
    %246 = tpu.dynamic_rotate %27 by %c210_i32 dim 1 : vector<8x256xf32>, i32 -> vector<8x256xf32>
    %c43 = arith.constant 43 : index
    %c0_106 = arith.constant 0 : index
    %c0_107 = arith.constant 0 : index
    %247 = vector.load %arg4[%c43, %c0_106, %c0_107] : memref<49x8x256xf32, #tpu.memory_space<vmem>>, vector<1x8x256xf32>
    %248 = vector.shape_cast %247 : vector<1x8x256xf32> to vector<8x256xf32>
    %249 = arith.mulf %246, %248 : vector<8x256xf32>
    %250 = arith.addf %230, %249 : vector<8x256xf32>
    %c209_i32 = arith.constant 209 : i32
    %251 = tpu.dynamic_rotate %27 by %c209_i32 dim 1 : vector<8x256xf32>, i32 -> vector<8x256xf32>
    %c44 = arith.constant 44 : index
    %c0_108 = arith.constant 0 : index
    %c0_109 = arith.constant 0 : index
    %252 = vector.load %arg4[%c44, %c0_108, %c0_109] : memref<49x8x256xf32, #tpu.memory_space<vmem>>, vector<1x8x256xf32>
    %253 = vector.shape_cast %252 : vector<1x8x256xf32> to vector<8x256xf32>
    %254 = arith.mulf %251, %253 : vector<8x256xf32>
    %255 = arith.addf %235, %254 : vector<8x256xf32>
    %c208_i32 = arith.constant 208 : i32
    %256 = tpu.dynamic_rotate %27 by %c208_i32 dim 1 : vector<8x256xf32>, i32 -> vector<8x256xf32>
    %c45 = arith.constant 45 : index
    %c0_110 = arith.constant 0 : index
    %c0_111 = arith.constant 0 : index
    %257 = vector.load %arg4[%c45, %c0_110, %c0_111] : memref<49x8x256xf32, #tpu.memory_space<vmem>>, vector<1x8x256xf32>
    %258 = vector.shape_cast %257 : vector<1x8x256xf32> to vector<8x256xf32>
    %259 = arith.mulf %256, %258 : vector<8x256xf32>
    %260 = arith.addf %240, %259 : vector<8x256xf32>
    %c207_i32 = arith.constant 207 : i32
    %261 = tpu.dynamic_rotate %27 by %c207_i32 dim 1 : vector<8x256xf32>, i32 -> vector<8x256xf32>
    %c46 = arith.constant 46 : index
    %c0_112 = arith.constant 0 : index
    %c0_113 = arith.constant 0 : index
    %262 = vector.load %arg4[%c46, %c0_112, %c0_113] : memref<49x8x256xf32, #tpu.memory_space<vmem>>, vector<1x8x256xf32>
    %263 = vector.shape_cast %262 : vector<1x8x256xf32> to vector<8x256xf32>
    %264 = arith.mulf %261, %263 : vector<8x256xf32>
    %265 = arith.addf %245, %264 : vector<8x256xf32>
    %c206_i32 = arith.constant 206 : i32
    %266 = tpu.dynamic_rotate %27 by %c206_i32 dim 1 : vector<8x256xf32>, i32 -> vector<8x256xf32>
    %c47 = arith.constant 47 : index
    %c0_114 = arith.constant 0 : index
    %c0_115 = arith.constant 0 : index
    %267 = vector.load %arg4[%c47, %c0_114, %c0_115] : memref<49x8x256xf32, #tpu.memory_space<vmem>>, vector<1x8x256xf32>
    %268 = vector.shape_cast %267 : vector<1x8x256xf32> to vector<8x256xf32>
    %269 = arith.mulf %266, %268 : vector<8x256xf32>
    %270 = arith.addf %250, %269 : vector<8x256xf32>
    %c205_i32 = arith.constant 205 : i32
    %271 = tpu.dynamic_rotate %27 by %c205_i32 dim 1 : vector<8x256xf32>, i32 -> vector<8x256xf32>
    %c48 = arith.constant 48 : index
    %c0_116 = arith.constant 0 : index
    %c0_117 = arith.constant 0 : index
    %272 = vector.load %arg4[%c48, %c0_116, %c0_117] : memref<49x8x256xf32, #tpu.memory_space<vmem>>, vector<1x8x256xf32>
    %273 = vector.shape_cast %272 : vector<1x8x256xf32> to vector<8x256xf32>
    %274 = arith.mulf %271, %273 : vector<8x256xf32>
    %275 = arith.addf %255, %274 : vector<8x256xf32>
    %276 = arith.addf %275, %260 : vector<8x256xf32>
    %277 = arith.addf %265, %270 : vector<8x256xf32>
    %278 = arith.addf %276, %277 : vector<8x256xf32>
    %279 = vector.extract_strided_slice %278 {offsets = [0, 0], sizes = [4, 256], strides = [1, 1]} : vector<8x256xf32> to vector<4x256xf32>
    %280 = vector.extract_strided_slice %278 {offsets = [4, 0], sizes = [4, 256], strides = [1, 1]} : vector<8x256xf32> to vector<4x256xf32>
    %281 = arith.addf %279, %280 : vector<4x256xf32>
    %c0_118 = arith.constant 0 : index
    %282 = memref.load %arg5[%c0_118] : memref<1xf32, #tpu.memory_space<smem>>
    %283 = vector.broadcast %282 : f32 to vector<4x256xf32>
    %284 = arith.addf %281, %283 : vector<4x256xf32>
    %285 = arith.negf %284 : vector<4x256xf32>
    %286 = math.exp %285 : vector<4x256xf32>
    %cst_119 = arith.constant 1.000000e+00 : f32
    %287 = vector.broadcast %cst_119 : f32 to vector<4x256xf32>
    %288 = arith.addf %287, %286 : vector<4x256xf32>
    %289 = arith.divf %287, %288 : vector<4x256xf32>
    %290 = vector.shape_cast %289 : vector<4x256xf32> to vector<4x1x256xf32>
    %291 = vector.broadcast %290 : vector<4x1x256xf32> to vector<4x32x256xf32>
    %292 = arith.mulf %22, %291 : vector<4x32x256xf32>
    %c0_120 = arith.constant 0 : index
    %c0_121 = arith.constant 0 : index
    %c0_122 = arith.constant 0 : index
    %293 = vector.load %arg6[%c0_120, %c0_121, %c0_122] : memref<4x32x256xf32, #tpu.memory_space<vmem>>, vector<4x32x256xf32>
    tpu.vector_store %arg6[%c0_120, %c0_121, %c0_122], %292 {strides = array<i32>} : memref<4x32x256xf32, #tpu.memory_space<vmem>>, vector<4x32x256xf32>,
    return
  }
  func.func @transform_0(%arg0: i32) -> (i32, i32, i32) {
    %c0_i32 = arith.constant 0 : i32
    %c0_i32_0 = arith.constant 0 : i32
    %c0_i32_1 = arith.constant 0 : i32
    return %arg0, %c0_i32, %c0_i32_0 : i32, i32, i32
  }
  func.func @transform_1(%arg0: i32) -> (i32, i32) {
    %c0_i32 = arith.constant 0 : i32
    %c0_i32_0 = arith.constant 0 : i32
    %c0_i32_1 = arith.constant 0 : i32
    return %c0_i32, %c0_i32_0 : i32, i32
  }
  func.func @transform_2(%arg0: i32) -> (i32, i32) {
    %c0_i32 = arith.constant 0 : i32
    %c0_i32_0 = arith.constant 0 : i32
    %c0_i32_1 = arith.constant 0 : i32
    return %c0_i32, %c0_i32_0 : i32, i32
  }
  func.func @transform_3(%arg0: i32) -> (i32, i32, i32) {
    %c0_i32 = arith.constant 0 : i32
    %c0_i32_0 = arith.constant 0 : i32
    %c0_i32_1 = arith.constant 0 : i32
    %c0_i32_2 = arith.constant 0 : i32
    return %c0_i32, %c0_i32_0, %c0_i32_1 : i32, i32, i32
  }
  func.func @transform_4(%arg0: i32) -> i32 {
    %c0_i32 = arith.constant 0 : i32
    %c0_i32_0 = arith.constant 0 : i32
    return %c0_i32 : i32
  }
  func.func @transform_5(%arg0: i32) -> (i32, i32, i32) {
    %c0_i32 = arith.constant 0 : i32
    %c0_i32_0 = arith.constant 0 : i32
    %c0_i32_1 = arith.constant 0 : i32
    return %arg0, %c0_i32, %c0_i32_0 : i32, i32, i32
  }
}

</mosaic_0001>

<llo_original>
// kernel: cbam_pallas.1
$region0: #{cbam_pallas.1}
  #allocation0 [shape = 'u32[]', space=smem, size = 0x4, offset = 0x4, fixed_abs, tag = 'smem constant byte address 0x4 - core index']
  #allocation1 [shape = 'u32[144,128]{1,0:T(1,128)}', space=vmem, size = 0x12000, scoped, tag = 'internal scratch']
  #allocation2 [shape = 'f32[1]{0:T(128)S(6)}', space=smem, size = 0x200, scoped, tag = 'scoped memory for cbam_pallas.1']
  %s0 = inlined_call_operand.vmem [shape: f32[4,32,256], index: 0, kind: input, shape index: {}]
  %s1 = inlined_call_operand.vmem [shape: f32[32,2], index: 1, kind: input, shape index: {}]
  %s2 = inlined_call_operand.vmem [shape: f32[2,32], index: 2, kind: input, shape index: {}]
  %s3 = inlined_call_operand.vmem [shape: f32[49,8,256], index: 3, kind: input, shape index: {}]
  %s4 = inlined_call_operand.<no memory space> [shape: f32[1], index: 4, kind: input, shape index: {}]
  %s5 = inlined_call_operand.vmem [shape: f32[4,32,256], index: 5, kind: output, shape index: {}]
  %s6 = sld [smem:[#allocation0]]
  $region30: #{cbam_pallas.1} parent=0
    _
  %s8 = ssub.s32 1, %s6
  %s9 = scalar_select 0, %s8, %s6
  %10 = sst [smem:[#allocation2]] %s4
  // Predicated region
  $region2: #{cbam_pallas.1} parent=0 // pred_check
    _
  $region3: #{cbam_pallas.1} parent=0 // pred_check_branch
    %12 = sbr.rel (0) target = $region5
  $region4: #{cbam_pallas.1} parent=0 // pred_region
    _
  $region5: #{cbam_pallas.1} parent=0 // pred_fallthru
    _
  // Predicated region
  $region6: #{cbam_pallas.1} parent=0 // pred_check
    _
  $region7: #{cbam_pallas.1} parent=0 // pred_check_branch
    %14 = sbr.rel (0) target = $region9
  $region8: #{cbam_pallas.1} parent=0 // pred_region
    _
  $region9: #{cbam_pallas.1} parent=0 // pred_fallthru
    _
  // Predicated region
  $region10: #{cbam_pallas.1} parent=0 // pred_check
    _
  $region11: #{cbam_pallas.1} parent=0 // pred_check_branch
    %16 = sbr.rel (0) target = $region13
  $region12: #{cbam_pallas.1} parent=0 // pred_region
    _
  $region13: #{cbam_pallas.1} parent=0 // pred_fallthru
    _
  // Predicated region
  $region14: #{cbam_pallas.1} parent=0 // pred_check
    _
  $region15: #{cbam_pallas.1} parent=0 // pred_check_branch
    %18 = sbr.rel (0) target = $region17
  $region16: #{cbam_pallas.1} parent=0 // pred_region
    _
  $region17: #{cbam_pallas.1} parent=0 // pred_fallthru
    _
  // Predicated region
  $region18: #{cbam_pallas.1} parent=0 // pred_check
    _
  $region19: #{cbam_pallas.1} parent=0 // pred_check_branch
    %20 = sbr.rel (0) target = $region21
  $region20: #{cbam_pallas.1} parent=0 // pred_region
    _
  $region21: #{cbam_pallas.1} parent=0 // pred_fallthru
    _
  %v21 = vld [vmem:[%s0] sm:$0xff]
  %v22 = vld [vmem:[%s0 + $0x8] sm:$0xff]
  %v23 = vld [vmem:[%s0 + $0x10] sm:$0xff]
  %v24 = vld [vmem:[%s0 + $0x18] sm:$0xff]
  %v25 = vld [vmem:[%s0 + $0x20] sm:$0xff]
  %v26 = vld [vmem:[%s0 + $0x28] sm:$0xff]
  %v27 = vld [vmem:[%s0 + $0x30] sm:$0xff]
  %v28 = vld [vmem:[%s0 + $0x38] sm:$0xff]
  %v29 = vld [vmem:[%s0 + $0x40] sm:$0xff]
  %v30 = vld [vmem:[%s0 + $0x48] sm:$0xff]
  %v31 = vld [vmem:[%s0 + $0x50] sm:$0xff]
  %v32 = vld [vmem:[%s0 + $0x58] sm:$0xff]
  %v33 = vld [vmem:[%s0 + $0x60] sm:$0xff]
  %v34 = vld [vmem:[%s0 + $0x68] sm:$0xff]
  %v35 = vld [vmem:[%s0 + $0x70] sm:$0xff]
  %v36 = vld [vmem:[%s0 + $0x78] sm:$0xff]
  %v37 = vld [vmem:[%s0 + $0x80] sm:$0xff]
  %v38 = vld [vmem:[%s0 + $0x88] sm:$0xff]
  %v39 = vld [vmem:[%s0 + $0x90] sm:$0xff]
  %v40 = vld [vmem:[%s0 + $0x98] sm:$0xff]
  %v41 = vld [vmem:[%s0 + $0xa0] sm:$0xff]
  %v42 = vld [vmem:[%s0 + $0xa8] sm:$0xff]
  %v43 = vld [vmem:[%s0 + $0xb0] sm:$0xff]
  %v44 = vld [vmem:[%s0 + $0xb8] sm:$0xff]
  %v45 = vld [vmem:[%s0 + $0xc0] sm:$0xff]
  %v46 = vld [vmem:[%s0 + $0xc8] sm:$0xff]
  %v47 = vld [vmem:[%s0 + $0xd0] sm:$0xff]
  %v48 = vld [vmem:[%s0 + $0xd8] sm:$0xff]
  %v49 = vld [vmem:[%s0 + $0xe0] sm:$0xff]
  %v50 = vld [vmem:[%s0 + $0xe8] sm:$0xff]
  %v51 = vld [vmem:[%s0 + $0xf0] sm:$0xff]
  %v52 = vld [vmem:[%s0 + $0xf8] sm:$0xff]
  %v53 = vadd.f32 %v21, %v22
  %54 = vadd.xlane.f32.xlu0 %v53
  %v55 = vpop.xlane.xlu0 %54
  %v56 = vadd.f32 %v23, %v24
  %57 = vadd.xlane.f32.xlu0 %v56
  %v58 = vpop.xlane.xlu0 %57
  %v59 = vadd.f32 %v25, %v26
  %60 = vadd.xlane.f32.xlu0 %v59
  %v61 = vpop.xlane.xlu0 %60
  %v62 = vadd.f32 %v27, %v28
  %63 = vadd.xlane.f32.xlu0 %v62
  %v64 = vpop.xlane.xlu0 %63
  %v65 = vadd.f32 %v29, %v30
  %66 = vadd.xlane.f32.xlu0 %v65
  %v67 = vpop.xlane.xlu0 %66
  %v68 = vadd.f32 %v31, %v32
  %69 = vadd.xlane.f32.xlu0 %v68
  %v70 = vpop.xlane.xlu0 %69
  %v71 = vadd.f32 %v33, %v34
  %72 = vadd.xlane.f32.xlu0 %v71
  %v73 = vpop.xlane.xlu0 %72
  %v74 = vadd.f32 %v35, %v36
  %75 = vadd.xlane.f32.xlu0 %v74
  %v76 = vpop.xlane.xlu0 %75
  %v77 = vadd.f32 %v37, %v38
  %78 = vadd.xlane.f32.xlu0 %v77
  %v79 = vpop.xlane.xlu0 %78
  %v80 = vadd.f32 %v39, %v40
  %81 = vadd.xlane.f32.xlu0 %v80
  %v82 = vpop.xlane.xlu0 %81
  %v83 = vadd.f32 %v41, %v42
  %84 = vadd.xlane.f32.xlu0 %v83
  %v85 = vpop.xlane.xlu0 %84
  %v86 = vadd.f32 %v43, %v44
  %87 = vadd.xlane.f32.xlu0 %v86
  %v88 = vpop.xlane.xlu0 %87
  %v89 = vadd.f32 %v45, %v46
  %90 = vadd.xlane.f32.xlu0 %v89
  %v91 = vpop.xlane.xlu0 %90
  %v92 = vadd.f32 %v47, %v48
  %93 = vadd.xlane.f32.xlu0 %v92
  %v94 = vpop.xlane.xlu0 %93
  %v95 = vadd.f32 %v49, %v50
  %96 = vadd.xlane.f32.xlu0 %v95
  %v97 = vpop.xlane.xlu0 %96
  %v98 = vadd.f32 %v51, %v52
  %99 = vadd.xlane.f32.xlu0 %v98
  %v100 = vpop.xlane.xlu0 %99
  %v101 = vmul.f32 %v55, 0.00390625
  %v102 = vmul.f32 %v58, 0.00390625
  %v103 = vmul.f32 %v61, 0.00390625
  %v104 = vmul.f32 %v64, 0.00390625
  %v105 = vmul.f32 %v67, 0.00390625
  %v106 = vmul.f32 %v70, 0.00390625
  %v107 = vmul.f32 %v73, 0.00390625
  %v108 = vmul.f32 %v76, 0.00390625
  %v109 = vmul.f32 %v79, 0.00390625
  %v110 = vmul.f32 %v82, 0.00390625
  %v111 = vmul.f32 %v85, 0.00390625
  %v112 = vmul.f32 %v88, 0.00390625
  %v113 = vmul.f32 %v91, 0.00390625
  %v114 = vmul.f32 %v94, 0.00390625
  %v115 = vmul.f32 %v97, 0.00390625
  %v116 = vmul.f32 %v100, 0.00390625
  %v117 = vmax.f32 %v21, %v22
  %118 = vmax.xlane.f32.xlu0 %v117
  %v119 = vpop.xlane.xlu0 %118
  %v120 = vmax.f32 %v23, %v24
  %121 = vmax.xlane.f32.xlu0 %v120
  %v122 = vpop.xlane.xlu0 %121
  %v123 = vmax.f32 %v25, %v26
  %124 = vmax.xlane.f32.xlu0 %v123
  %v125 = vpop.xlane.xlu0 %124
  %v126 = vmax.f32 %v27, %v28
  %127 = vmax.xlane.f32.xlu0 %v126
  %v128 = vpop.xlane.xlu0 %127
  %v129 = vmax.f32 %v29, %v30
  %130 = vmax.xlane.f32.xlu0 %v129
  %v131 = vpop.xlane.xlu0 %130
  %v132 = vmax.f32 %v31, %v32
  %133 = vmax.xlane.f32.xlu0 %v132
  %v134 = vpop.xlane.xlu0 %133
  %v135 = vmax.f32 %v33, %v34
  %136 = vmax.xlane.f32.xlu0 %v135
  %v137 = vpop.xlane.xlu0 %136
  %v138 = vmax.f32 %v35, %v36
  %139 = vmax.xlane.f32.xlu0 %v138
  %v140 = vpop.xlane.xlu0 %139
  %v141 = vmax.f32 %v37, %v38
  %142 = vmax.xlane.f32.xlu0 %v141
  %v143 = vpop.xlane.xlu0 %142
  %v144 = vmax.f32 %v39, %v40
  %145 = vmax.xlane.f32.xlu0 %v144
  %v146 = vpop.xlane.xlu0 %145
  %v147 = vmax.f32 %v41, %v42
  %148 = vmax.xlane.f32.xlu0 %v147
  %v149 = vpop.xlane.xlu0 %148
  %v150 = vmax.f32 %v43, %v44
  %151 = vmax.xlane.f32.xlu0 %v150
  %v152 = vpop.xlane.xlu0 %151
  %v153 = vmax.f32 %v45, %v46
  %154 = vmax.xlane.f32.xlu0 %v153
  %v155 = vpop.xlane.xlu0 %154
  %v156 = vmax.f32 %v47, %v48
  %157 = vmax.xlane.f32.xlu0 %v156
  %v158 = vpop.xlane.xlu0 %157
  %v159 = vmax.f32 %v49, %v50
  %160 = vmax.xlane.f32.xlu0 %v159
  %v161 = vpop.xlane.xlu0 %160
  %v162 = vmax.f32 %v51, %v52
  %163 = vmax.xlane.f32.xlu0 %v162
  %v164 = vpop.xlane.xlu0 %163
  %v181 = vlaneseq
  %v182 = vand.u32 %v181, 127
  %v183 = vlaneseq
  %v184 = vshrl.u32 %v183, 7
  %v185 = vsub.s32 %v182, %v184
  %v186 = vrot.slane %v101, %v185
  %v187 = vadd.s32 %v182, 4294967288
  %v188 = vlaneseq
  %v189 = vshrl.u32 %v188, 7
  %v190 = vsub.s32 %v187, %v189
  %v191 = vrot.slane %v102, %v190
  %vm192 = vcmask 130112
  %v193 = vsel %vm192, %v191, %v186
  %v194 = vadd.s32 %v182, 4294967280
  %v195 = vlaneseq
  %v196 = vshrl.u32 %v195, 7
  %v197 = vsub.s32 %v194, %v196
  %v198 = vrot.slane %v103, %v197
  %vm199 = vcmask 195712
  %v200 = vsel %vm199, %v198, %v193
  %v201 = vadd.s32 %v182, 4294967272
  %v202 = vlaneseq
  %v203 = vshrl.u32 %v202, 7
  %v204 = vsub.s32 %v201, %v203
  %v205 = vrot.slane %v104, %v204
  %vm206 = vcmask 261312
  %v207 = vsel %vm206, %v205, %v200
  %v208 = vlaneseq
  %v209 = vshrl.u32 %v208, 7
  %v210 = vsub.s32 %v182, %v209
  %v211 = vrot.slane %v105, %v210
  %v212 = vlaneseq
  %v213 = vshrl.u32 %v212, 7
  %v214 = vsub.s32 %v187, %v213
  %v215 = vrot.slane %v106, %v214
  %v216 = vsel %vm192, %v215, %v211
  %v217 = vlaneseq
  %v218 = vshrl.u32 %v217, 7
  %v219 = vsub.s32 %v194, %v218
  %v220 = vrot.slane %v107, %v219
  %v221 = vsel %vm199, %v220, %v216
  %v222 = vlaneseq
  %v223 = vshrl.u32 %v222, 7
  %v224 = vsub.s32 %v201, %v223
  %v225 = vrot.slane %v108, %v224
  %v226 = vsel %vm206, %v225, %v221
  %v227 = vlaneseq
  %v228 = vshrl.u32 %v227, 7
  %v229 = vsub.s32 %v182, %v228
  %v230 = vrot.slane %v109, %v229
  %v231 = vlaneseq
  %v232 = vshrl.u32 %v231, 7
  %v233 = vsub.s32 %v187, %v232
  %v234 = vrot.slane %v110, %v233
  %v235 = vsel %vm192, %v234, %v230
  %v236 = vlaneseq
  %v237 = vshrl.u32 %v236, 7
  %v238 = vsub.s32 %v194, %v237
  %v239 = vrot.slane %v111, %v238
  %v240 = vsel %vm199, %v239, %v235
  %v241 = vlaneseq
  %v242 = vshrl.u32 %v241, 7
  %v243 = vsub.s32 %v201, %v242
  %v244 = vrot.slane %v112, %v243
  %v245 = vsel %vm206, %v244, %v240
  %v246 = vlaneseq
  %v247 = vshrl.u32 %v246, 7
  %v248 = vsub.s32 %v182, %v247
  %v249 = vrot.slane %v113, %v248
  %v250 = vlaneseq
  %v251 = vshrl.u32 %v250, 7
  %v252 = vsub.s32 %v187, %v251
  %v253 = vrot.slane %v114, %v252
  %v254 = vsel %vm192, %v253, %v249
  %v255 = vlaneseq
  %v256 = vshrl.u32 %v255, 7
  %v257 = vsub.s32 %v194, %v256
  %v258 = vrot.slane %v115, %v257
  %v259 = vsel %vm199, %v258, %v254
  %v260 = vlaneseq
  %v261 = vshrl.u32 %v260, 7
  %v262 = vsub.s32 %v201, %v261
  %v263 = vrot.slane %v116, %v262
  %v264 = vsel %vm206, %v263, %v259
  %vm265 = vcmask 1041409
  %v266 = vsel %vm265, %v226, %v207
  %vm267 = vcmask 1042434
  %v268 = vsel %vm267, %v245, %v266
  %vm269 = vcmask 1043459
  %v270 = vsel %vm269, %v264, %v268
  %v288 = vlaneseq
  %v289 = vshrl.u32 %v288, 7
  %v290 = vsub.s32 %v182, %v289
  %v291 = vrot.slane %v119, %v290
  %v292 = vlaneseq
  %v293 = vshrl.u32 %v292, 7
  %v294 = vsub.s32 %v187, %v293
  %v295 = vrot.slane %v122, %v294
  %v296 = vsel %vm192, %v295, %v291
  %v297 = vlaneseq
  %v298 = vshrl.u32 %v297, 7
  %v299 = vsub.s32 %v194, %v298
  %v300 = vrot.slane %v125, %v299
  %v301 = vsel %vm199, %v300, %v296
  %v302 = vlaneseq
  %v303 = vshrl.u32 %v302, 7
  %v304 = vsub.s32 %v201, %v303
  %v305 = vrot.slane %v128, %v304
  %v306 = vsel %vm206, %v305, %v301
  %v307 = vlaneseq
  %v308 = vshrl.u32 %v307, 7
  %v309 = vsub.s32 %v182, %v308
  %v310 = vrot.slane %v131, %v309
  %v311 = vlaneseq
  %v312 = vshrl.u32 %v311, 7
  %v313 = vsub.s32 %v187, %v312
  %v314 = vrot.slane %v134, %v313
  %v315 = vsel %vm192, %v314, %v310
  %v316 = vlaneseq
  %v317 = vshrl.u32 %v316, 7
  %v318 = vsub.s32 %v194, %v317
  %v319 = vrot.slane %v137, %v318
  %v320 = vsel %vm199, %v319, %v315
  %v321 = vlaneseq
  %v322 = vshrl.u32 %v321, 7
  %v323 = vsub.s32 %v201, %v322
  %v324 = vrot.slane %v140, %v323
  %v325 = vsel %vm206, %v324, %v320
  %v326 = vlaneseq
  %v327 = vshrl.u32 %v326, 7
  %v328 = vsub.s32 %v182, %v327
  %v329 = vrot.slane %v143, %v328
  %v330 = vlaneseq
  %v331 = vshrl.u32 %v330, 7
  %v332 = vsub.s32 %v187, %v331
  %v333 = vrot.slane %v146, %v332
  %v334 = vsel %vm192, %v333, %v329
  %v335 = vlaneseq
  %v336 = vshrl.u32 %v335, 7
  %v337 = vsub.s32 %v194, %v336
  %v338 = vrot.slane %v149, %v337
  %v339 = vsel %vm199, %v338, %v334
  %v340 = vlaneseq
  %v341 = vshrl.u32 %v340, 7
  %v342 = vsub.s32 %v201, %v341
  %v343 = vrot.slane %v152, %v342
  %v344 = vsel %vm206, %v343, %v339
  %v345 = vlaneseq
  %v346 = vshrl.u32 %v345, 7
  %v347 = vsub.s32 %v182, %v346
  %v348 = vrot.slane %v155, %v347
  %v349 = vlaneseq
  %v350 = vshrl.u32 %v349, 7
  %v351 = vsub.s32 %v187, %v350
  %v352 = vrot.slane %v158, %v351
  %v353 = vsel %vm192, %v352, %v348
  %v354 = vlaneseq
  %v355 = vshrl.u32 %v354, 7
  %v356 = vsub.s32 %v194, %v355
  %v357 = vrot.slane %v161, %v356
  %v358 = vsel %vm199, %v357, %v353
  %v359 = vlaneseq
  %v360 = vshrl.u32 %v359, 7
  %v361 = vsub.s32 %v201, %v360
  %v362 = vrot.slane %v164, %v361
  %v363 = vsel %vm206, %v362, %v358
  %vm364 = vcmask 1045509
  %v365 = vsel %vm364, %v325, %v306
  %vm366 = vcmask 1046534
  %v367 = vsel %vm366, %v344, %v365
  %vm368 = vcmask 1047559
  %v369 = vsel %vm368, %v363, %v367
  %vm371 = vcmask 1043456
  %v372 = vsel %vm371, %v270, %v369
  %v373 = vld [vmem:[%s1] sm:$0xff]
  %v374 = vld [vmem:[%s1 + $0x8] sm:$0xff]
  %v375 = vld [vmem:[%s1 + $0x10] sm:$0xff]
  %v376 = vld [vmem:[%s1 + $0x18] sm:$0xff]
  %vm377 = vcmask 261120
  %v379 = vsel %vm377, %v372, 0
  %381 = vmatprep.subr.mxu0 0.0
  %382 = vmatpush1.msra.mxu0 %v373
  %383 = vmatprep.subr.mxu0 0.0
  %384 = vmatpush1.msra.mxu0 %v374
  %385 = vmatprep.subr.mxu0 0.0
  %386 = vmatpush1.msra.mxu0 %v375
  %387 = vmatprep.subr.mxu0 0.0
  %388 = vmatpush1.msra.mxu0 %v376
  %389 = vmatprep.subr.mxu0 0.0
  %390 = vmatpush1.msra.mxu0 0.0
  %391 = vmatprep.subr.mxu0 0.0
  %392 = vmatpush1.msra.mxu0 0.0
  %393 = vmatprep.subr.mxu0 0.0
  %394 = vmatpush1.msra.mxu0 0.0
  %395 = vmatprep.subr.mxu0 0.0
  %396 = vmatpush1.msra.mxu0 0.0
  %397 = vmatprep.subr.mxu0 0.0
  %398 = vmatpush1.msra.mxu0 0.0
  %399 = vmatprep.subr.mxu0 0.0
  %400 = vmatpush1.msra.mxu0 0.0
  %401 = vmatprep.subr.mxu0 0.0
  %402 = vmatpush1.msra.mxu0 0.0
  %403 = vmatprep.subr.mxu0 0.0
  %404 = vmatpush1.msra.mxu0 0.0
  %405 = vmatprep.subr.mxu0 0.0
  %406 = vmatpush1.msra.mxu0 0.0
  %407 = vmatprep.subr.mxu0 0.0
  %408 = vmatpush1.msra.mxu0 0.0
  %409 = vmatprep.subr.mxu0 0.0
  %410 = vmatpush1.msra.mxu0 0.0
  %411 = vmatprep.subr.mxu0 0.0
  %412 = vmatpush1.msra.mxu0 0.0
  %413 = vmatprep.subr.mxu0 0.0
  %414 = vmatpush1.msra.mxu0 0.0
  %415 = vmatprep.subr.mxu0 0.0
  %416 = vmatpush1.msra.mxu0 0.0
  %417 = vmatprep.subr.mxu0 0.0
  %418 = vmatpush1.msra.mxu0 0.0
  %419 = vmatprep.subr.mxu0 0.0
  %420 = vmatpush1.msra.mxu0 0.0
  %421 = vmatprep.subr.mxu0 0.0
  %422 = vmatpush1.msra.mxu0 0.0
  %423 = vmatprep.subr.mxu0 0.0
  %424 = vmatpush1.msra.mxu0 0.0
  %425 = vmatprep.subr.mxu0 0.0
  %426 = vmatpush1.msra.mxu0 0.0
  %427 = vmatprep.subr.mxu0 0.0
  %428 = vmatpush1.msra.mxu0 0.0
  %429 = vmatprep.subr.mxu0 0.0
  %430 = vmatpush1.msra.mxu0 0.0
  %431 = vmatprep.subr.mxu0 0.0
  %432 = vmatpush1.msra.mxu0 0.0
  %433 = vmatprep.subr.mxu0 0.0
  %434 = vmatpush1.msra.mxu0 0.0
  %435 = vmatprep.subr.mxu0 0.0
  %436 = vmatpush1.msra.mxu0 0.0
  %437 = vmatprep.subr.mxu0 0.0
  %438 = vmatpush1.msra.mxu0 0.0
  %439 = vmatprep.subr.mxu0 0.0
  %440 = vmatpush1.msra.mxu0 0.0
  %441 = vmatprep.subr.mxu0 0.0
  %442 = vmatpush1.msra.mxu0 0.0
  %443 = vmatprep.subr.mxu0 0.0
  %444 = vmatpush1.msra.mxu0 0.0
  %445 = vmatprep.mubr.f32.mxu0 0.0
  %446 = vmatmul.mubr.f32.gmra.mrb[0].mxu0 %v379
  %v447 = vpop.f32.mrb[0].mxu0
  %v448 = vadd.f32 0.0, %v447
  %v449 = vpop.f32.mrb[0].mxu0
  %450 = vdwg.mxu0
  %v451 = vmax.f32 %v448, 0.0
  %v452 = vld [vmem:[%s2] sm:$0x3]
  %vm453 = vcmask 15360
  %v455 = vsel %vm453, %v451, 0
  %vm457 = vcmask 1041408
  %v459 = vsel %vm457, %v452, 0
  %461 = vmatprep.subr.mxu0 0.0
  %462 = vmatpush1.msra.mxu0 %v459
  %463 = vmatprep.subr.mxu0 0.0
  %464 = vmatpush1.msra.mxu0 0.0
  %465 = vmatprep.subr.mxu0 0.0
  %466 = vmatpush1.msra.mxu0 0.0
  %467 = vmatprep.subr.mxu0 0.0
  %468 = vmatpush1.msra.mxu0 0.0
  %469 = vmatprep.subr.mxu0 0.0
  %470 = vmatpush1.msra.mxu0 0.0
  %471 = vmatprep.subr.mxu0 0.0
  %472 = vmatpush1.msra.mxu0 0.0
  %473 = vmatprep.subr.mxu0 0.0
  %474 = vmatpush1.msra.mxu0 0.0
  %475 = vmatprep.subr.mxu0 0.0
  %476 = vmatpush1.msra.mxu0 0.0
  %477 = vmatprep.subr.mxu0 0.0
  %478 = vmatpush1.msra.mxu0 0.0
  %479 = vmatprep.subr.mxu0 0.0
  %480 = vmatpush1.msra.mxu0 0.0
  %481 = vmatprep.subr.mxu0 0.0
  %482 = vmatpush1.msra.mxu0 0.0
  %483 = vmatprep.subr.mxu0 0.0
  %484 = vmatpush1.msra.mxu0 0.0
  %485 = vmatprep.subr.mxu0 0.0
  %486 = vmatpush1.msra.mxu0 0.0
  %487 = vmatprep.subr.mxu0 0.0
  %488 = vmatpush1.msra.mxu0 0.0
  %489 = vmatprep.subr.mxu0 0.0
  %490 = vmatpush1.msra.mxu0 0.0
  %491 = vmatprep.subr.mxu0 0.0
  %492 = vmatpush1.msra.mxu0 0.0
  %493 = vmatprep.subr.mxu0 0.0
  %494 = vmatpush1.msra.mxu0 0.0
  %495 = vmatprep.subr.mxu0 0.0
  %496 = vmatpush1.msra.mxu0 0.0
  %497 = vmatprep.subr.mxu0 0.0
  %498 = vmatpush1.msra.mxu0 0.0
  %499 = vmatprep.subr.mxu0 0.0
  %500 = vmatpush1.msra.mxu0 0.0
  %501 = vmatprep.subr.mxu0 0.0
  %502 = vmatpush1.msra.mxu0 0.0
  %503 = vmatprep.subr.mxu0 0.0
  %504 = vmatpush1.msra.mxu0 0.0
  %505 = vmatprep.subr.mxu0 0.0
  %506 = vmatpush1.msra.mxu0 0.0
  %507 = vmatprep.subr.mxu0 0.0
  %508 = vmatpush1.msra.mxu0 0.0
  %509 = vmatprep.subr.mxu0 0.0
  %510 = vmatpush1.msra.mxu0 0.0
  %511 = vmatprep.subr.mxu0 0.0
  %512 = vmatpush1.msra.mxu0 0.0
  %513 = vmatprep.subr.mxu0 0.0
  %514 = vmatpush1.msra.mxu0 0.0
  %515 = vmatprep.subr.mxu0 0.0
  %516 = vmatpush1.msra.mxu0 0.0
  %517 = vmatprep.subr.mxu0 0.0
  %518 = vmatpush1.msra.mxu0 0.0
  %519 = vmatprep.subr.mxu0 0.0
  %520 = vmatpush1.msra.mxu0 0.0
  %521 = vmatprep.subr.mxu0 0.0
  %522 = vmatpush1.msra.mxu0 0.0
  %523 = vmatprep.subr.mxu0 0.0
  %524 = vmatpush1.msra.mxu0 0.0
  %525 = vmatprep.mubr.f32.mxu0 0.0
  %526 = vmatmul.mubr.f32.gmra.mrb[0].mxu0 %v455
  %v527 = vpop.f32.mrb[0].mxu0
  %v528 = vadd.f32 0.0, %v527
  %v529 = vpop.f32.mrb[0].mxu0
  %530 = vdwg.mxu0
  %v532 = vrot.slane %v528, 4
  %v534 = vadd.f32 %v528, %v532
  %v535 = vxor.u32 %v534, 2147483648
  %v536 = vmul.f32 %v535, 1.442695
  %v537 = vpow.pop %v536
  %v538 = vadd.f32 %v537, 1.0
  %v539 = vrcp.pop %v538
  %v540 = vmul.f32 1.0, %v539
  %v541 = vlaneseq
  %v542 = vshrl.u32 %v541, 7
  %v543 = vsub.s32 0, %v542
  %v544 = vrot.slane %v540, %v543
  %546 = vbcast.lane.b32.xlu0 %v544, 256
  %v547 = vpop.permute.xlu0 %546
  %s549 = sor.u32 256, 8
  %550 = vbcast.lane.b32.xlu0 %v544, %s549
  %v551 = vpop.permute.xlu0 %550
  %s553 = sor.u32 256, 16
  %554 = vbcast.lane.b32.xlu0 %v544, %s553
  %v555 = vpop.permute.xlu0 %554
  %s557 = sor.u32 256, 24
  %558 = vbcast.lane.b32.xlu0 %v544, %s557
  %v559 = vpop.permute.xlu0 %558
  %v560 = vlaneseq
  %v561 = vshrl.u32 %v560, 7
  %v562 = vsub.s32 1, %v561
  %v563 = vrot.slane %v540, %v562
  %565 = vbcast.lane.b32.xlu0 %v563, 256
  %v566 = vpop.permute.xlu0 %565
  %s568 = sor.u32 256, 8
  %569 = vbcast.lane.b32.xlu0 %v563, %s568
  %v570 = vpop.permute.xlu0 %569
  %s572 = sor.u32 256, 16
  %573 = vbcast.lane.b32.xlu0 %v563, %s572
  %v574 = vpop.permute.xlu0 %573
  %s576 = sor.u32 256, 24
  %577 = vbcast.lane.b32.xlu0 %v563, %s576
  %v578 = vpop.permute.xlu0 %577
  %v579 = vlaneseq
  %v580 = vshrl.u32 %v579, 7
  %v581 = vsub.s32 2, %v580
  %v582 = vrot.slane %v540, %v581
  %584 = vbcast.lane.b32.xlu0 %v582, 256
  %v585 = vpop.permute.xlu0 %584
  %s587 = sor.u32 256, 8
  %588 = vbcast.lane.b32.xlu0 %v582, %s587
  %v589 = vpop.permute.xlu0 %588
  %s591 = sor.u32 256, 16
  %592 = vbcast.lane.b32.xlu0 %v582, %s591
  %v593 = vpop.permute.xlu0 %592
  %s595 = sor.u32 256, 24
  %596 = vbcast.lane.b32.xlu0 %v582, %s595
  %v597 = vpop.permute.xlu0 %596
  %v598 = vlaneseq
  %v599 = vshrl.u32 %v598, 7
  %v600 = vsub.s32 3, %v599
  %v601 = vrot.slane %v540, %v600
  %603 = vbcast.lane.b32.xlu0 %v601, 256
  %v604 = vpop.permute.xlu0 %603
  %s606 = sor.u32 256, 8
  %607 = vbcast.lane.b32.xlu0 %v601, %s606
  %v608 = vpop.permute.xlu0 %607
  %s610 = sor.u32 256, 16
  %611 = vbcast.lane.b32.xlu0 %v601, %s610
  %v612 = vpop.permute.xlu0 %611
  %s614 = sor.u32 256, 24
  %615 = vbcast.lane.b32.xlu0 %v601, %s614
  %v616 = vpop.permute.xlu0 %615
  %v617 = vmul.f32 %v21, %v547
  %v618 = vmul.f32 %v22, %v547
  %v619 = vmul.f32 %v23, %v551
  %v620 = vmul.f32 %v24, %v551
  %v621 = vmul.f32 %v25, %v555
  %v622 = vmul.f32 %v26, %v555
  %v623 = vmul.f32 %v27, %v559
  %v624 = vmul.f32 %v28, %v559
  %v625 = vmul.f32 %v29, %v566
  %v626 = vmul.f32 %v30, %v566
  %v627 = vmul.f32 %v31, %v570
  %v628 = vmul.f32 %v32, %v570
  %v629 = vmul.f32 %v33, %v574
  %v630 = vmul.f32 %v34, %v574
  %v631 = vmul.f32 %v35, %v578
  %v632 = vmul.f32 %v36, %v578
  %v633 = vmul.f32 %v37, %v585
  %v634 = vmul.f32 %v38, %v585
  %v635 = vmul.f32 %v39, %v589
  %v636 = vmul.f32 %v40, %v589
  %v637 = vmul.f32 %v41, %v593
  %v638 = vmul.f32 %v42, %v593
  %v639 = vmul.f32 %v43, %v597
  %v640 = vmul.f32 %v44, %v597
  %v641 = vmul.f32 %v45, %v604
  %v642 = vmul.f32 %v46, %v604
  %v643 = vmul.f32 %v47, %v608
  %v644 = vmul.f32 %v48, %v608
  %v645 = vmul.f32 %v49, %v612
  %v646 = vmul.f32 %v50, %v612
  %v647 = vmul.f32 %v51, %v616
  %v648 = vmul.f32 %v52, %v616
  %v649 = vadd.f32 %v617, %v619
  %v650 = vadd.f32 %v649, %v621
  %v651 = vadd.f32 %v650, %v623
  %v652 = vrot.slane %v651, 4
  %v653 = vadd.f32 %v651, %v652
  %v654 = vrot.slane %v653, 2
  %v655 = vadd.f32 %v653, %v654
  %v656 = vrot.slane %v655, 1
  %v657 = vadd.f32 %v655, %v656
  %v658 = vadd.f32 %v618, %v620
  %v659 = vadd.f32 %v658, %v622
  %v660 = vadd.f32 %v659, %v624
  %v661 = vrot.slane %v660, 4
  %v662 = vadd.f32 %v660, %v661
  %v663 = vrot.slane %v662, 2
  %v664 = vadd.f32 %v662, %v663
  %v665 = vrot.slane %v664, 1
  %v666 = vadd.f32 %v664, %v665
  %v667 = vadd.f32 %v625, %v627
  %v668 = vadd.f32 %v667, %v629
  %v669 = vadd.f32 %v668, %v631
  %v670 = vrot.slane %v669, 4
  %v671 = vadd.f32 %v669, %v670
  %v672 = vrot.slane %v671, 2
  %v673 = vadd.f32 %v671, %v672
  %v674 = vrot.slane %v673, 1
  %v675 = vadd.f32 %v673, %v674
  %v676 = vadd.f32 %v626, %v628
  %v677 = vadd.f32 %v676, %v630
  %v678 = vadd.f32 %v677, %v632
  %v679 = vrot.slane %v678, 4
  %v680 = vadd.f32 %v678, %v679
  %v681 = vrot.slane %v680, 2
  %v682 = vadd.f32 %v680, %v681
  %v683 = vrot.slane %v682, 1
  %v684 = vadd.f32 %v682, %v683
  %v685 = vadd.f32 %v633, %v635
  %v686 = vadd.f32 %v685, %v637
  %v687 = vadd.f32 %v686, %v639
  %v688 = vrot.slane %v687, 4
  %v689 = vadd.f32 %v687, %v688
  %v690 = vrot.slane %v689, 2
  %v691 = vadd.f32 %v689, %v690
  %v692 = vrot.slane %v691, 1
  %v693 = vadd.f32 %v691, %v692
  %v694 = vadd.f32 %v634, %v636
  %v695 = vadd.f32 %v694, %v638
  %v696 = vadd.f32 %v695, %v640
  %v697 = vrot.slane %v696, 4
  %v698 = vadd.f32 %v696, %v697
  %v699 = vrot.slane %v698, 2
  %v700 = vadd.f32 %v698, %v699
  %v701 = vrot.slane %v700, 1
  %v702 = vadd.f32 %v700, %v701
  %v703 = vadd.f32 %v641, %v643
  %v704 = vadd.f32 %v703, %v645
  %v705 = vadd.f32 %v704, %v647
  %v706 = vrot.slane %v705, 4
  %v707 = vadd.f32 %v705, %v706
  %v708 = vrot.slane %v707, 2
  %v709 = vadd.f32 %v707, %v708
  %v710 = vrot.slane %v709, 1
  %v711 = vadd.f32 %v709, %v710
  %v712 = vadd.f32 %v642, %v644
  %v713 = vadd.f32 %v712, %v646
  %v714 = vadd.f32 %v713, %v648
  %v715 = vrot.slane %v714, 4
  %v716 = vadd.f32 %v714, %v715
  %v717 = vrot.slane %v716, 2
  %v718 = vadd.f32 %v716, %v717
  %v719 = vrot.slane %v718, 1
  %v720 = vadd.f32 %v718, %v719
  %v721 = vmul.f32 %v657, 0.03125
  %v722 = vmul.f32 %v666, 0.03125
  %v723 = vmul.f32 %v675, 0.03125
  %v724 = vmul.f32 %v684, 0.03125
  %v725 = vmul.f32 %v693, 0.03125
  %v726 = vmul.f32 %v702, 0.03125
  %v727 = vmul.f32 %v711, 0.03125
  %v728 = vmul.f32 %v720, 0.03125
  %v729 = vmax.f32 %v617, %v619
  %v730 = vmax.f32 %v729, %v621
  %v731 = vmax.f32 %v730, %v623
  %v732 = vrot.slane %v731, 4
  %v733 = vmax.f32 %v731, %v732
  %v734 = vrot.slane %v733, 2
  %v735 = vmax.f32 %v733, %v734
  %v736 = vrot.slane %v735, 1
  %v737 = vmax.f32 %v735, %v736
  %v738 = vmax.f32 %v618, %v620
  %v739 = vmax.f32 %v738, %v622
  %v740 = vmax.f32 %v739, %v624
  %v741 = vrot.slane %v740, 4
  %v742 = vmax.f32 %v740, %v741
  %v743 = vrot.slane %v742, 2
  %v744 = vmax.f32 %v742, %v743
  %v745 = vrot.slane %v744, 1
  %v746 = vmax.f32 %v744, %v745
  %v747 = vmax.f32 %v625, %v627
  %v748 = vmax.f32 %v747, %v629
  %v749 = vmax.f32 %v748, %v631
  %v750 = vrot.slane %v749, 4
  %v751 = vmax.f32 %v749, %v750
  %v752 = vrot.slane %v751, 2
  %v753 = vmax.f32 %v751, %v752
  %v754 = vrot.slane %v753, 1
  %v755 = vmax.f32 %v753, %v754
  %v756 = vmax.f32 %v626, %v628
  %v757 = vmax.f32 %v756, %v630
  %v758 = vmax.f32 %v757, %v632
  %v759 = vrot.slane %v758, 4
  %v760 = vmax.f32 %v758, %v759
  %v761 = vrot.slane %v760, 2
  %v762 = vmax.f32 %v760, %v761
  %v763 = vrot.slane %v762, 1
  %v764 = vmax.f32 %v762, %v763
  %v765 = vmax.f32 %v633, %v635
  %v766 = vmax.f32 %v765, %v637
  %v767 = vmax.f32 %v766, %v639
  %v768 = vrot.slane %v767, 4
  %v769 = vmax.f32 %v767, %v768
  %v770 = vrot.slane %v769, 2
  %v771 = vmax.f32 %v769, %v770
  %v772 = vrot.slane %v771, 1
  %v773 = vmax.f32 %v771, %v772
  %v774 = vmax.f32 %v634, %v636
  %v775 = vmax.f32 %v774, %v638
  %v776 = vmax.f32 %v775, %v640
  %v777 = vrot.slane %v776, 4
  %v778 = vmax.f32 %v776, %v777
  %v779 = vrot.slane %v778, 2
  %v780 = vmax.f32 %v778, %v779
  %v781 = vrot.slane %v780, 1
  %v782 = vmax.f32 %v780, %v781
  %v783 = vmax.f32 %v641, %v643
  %v784 = vmax.f32 %v783, %v645
  %v785 = vmax.f32 %v784, %v647
  %v786 = vrot.slane %v785, 4
  %v787 = vmax.f32 %v785, %v786
  %v788 = vrot.slane %v787, 2
  %v789 = vmax.f32 %v787, %v788
  %v790 = vrot.slane %v789, 1
  %v791 = vmax.f32 %v789, %v790
  %v792 = vmax.f32 %v642, %v644
  %v793 = vmax.f32 %v792, %v646
  %v794 = vmax.f32 %v793, %v648
  %v795 = vrot.slane %v794, 4
  %v796 = vmax.f32 %v794, %v795
  %v797 = vrot.slane %v796, 2
  %v798 = vmax.f32 %v796, %v797
  %v799 = vrot.slane %v798, 1
  %v800 = vmax.f32 %v798, %v799
  %v809 = vsel %vm265, %v723, %v721
  %v810 = vsel %vm267, %v725, %v809
  %v811 = vsel %vm269, %v727, %v810
  %v812 = vsel %vm265, %v724, %v722
  %v813 = vsel %vm267, %v726, %v812
  %v814 = vsel %vm269, %v728, %v813
  %v825 = vsel %vm364, %v755, %v737
  %v826 = vsel %vm366, %v773, %v825
  %v827 = vsel %vm368, %v791, %v826
  %v828 = vsel %vm364, %v764, %v746
  %v829 = vsel %vm366, %v782, %v828
  %v830 = vsel %vm368, %v800, %v829
  %v833 = vsel %vm371, %v811, %v827
  %v834 = vsel %vm371, %v814, %v830
  %835 = vrot.lane.b32.xlu0 %v833, 51
  %v836 = vpop.permute.xlu0 %835
  %837 = vrot.lane.b32.xlu0 %v834, 51
  %v838 = vpop.permute.xlu0 %837
  %vm839 = vcmp.lt.s32.totalorder %v182, 51
  %v840 = vsel %vm839, %v836, %v838
  %v841 = vsel %vm839, %v838, %v836
  %v842 = vld [vmem:[%s3] sm:$0xff]
  %v843 = vld [vmem:[%s3 + $0x8] sm:$0xff]
  %v844 = vmul.f32 %v841, %v842
  %v845 = vmul.f32 %v840, %v843
  %v846 = vadd.f32 %v844, 0.0
  %v847 = vadd.f32 %v845, 0.0
  %848 = vrot.lane.b32.xlu0 %v833, 50
  %v849 = vpop.permute.xlu0 %848
  %850 = vrot.lane.b32.xlu0 %v834, 50
  %v851 = vpop.permute.xlu0 %850
  %vm852 = vcmp.lt.s32.totalorder %v182, 50
  %v853 = vsel %vm852, %v849, %v851
  %v854 = vsel %vm852, %v851, %v849
  %s855 = scalar_lea.vmem %s3, 16
  %v856 = vld [vmem:[%s855] sm:$0xff]
  %v857 = vld [vmem:[%s855 + $0x8] sm:$0xff]
  %v858 = vmul.f32 %v854, %v856
  %v859 = vmul.f32 %v853, %v857
  %v860 = vadd.f32 %v858, 0.0
  %v861 = vadd.f32 %v859, 0.0
  %862 = vrot.lane.b32.xlu0 %v833, 49
  %v863 = vpop.permute.xlu0 %862
  %864 = vrot.lane.b32.xlu0 %v834, 49
  %v865 = vpop.permute.xlu0 %864
  %vm866 = vcmp.lt.s32.totalorder %v182, 49
  %v867 = vsel %vm866, %v863, %v865
  %v868 = vsel %vm866, %v865, %v863
  %s869 = scalar_lea.vmem %s3, 32
  %v870 = vld [vmem:[%s869] sm:$0xff]
  %v871 = vld [vmem:[%s869 + $0x8] sm:$0xff]
  %v872 = vmul.f32 %v868, %v870
  %v873 = vmul.f32 %v867, %v871
  %v874 = vadd.f32 %v872, 0.0
  %v875 = vadd.f32 %v873, 0.0
  %876 = vrot.lane.b32.xlu0 %v833, 48
  %v877 = vpop.permute.xlu0 %876
  %878 = vrot.lane.b32.xlu0 %v834, 48
  %v879 = vpop.permute.xlu0 %878
  %vm880 = vcmp.lt.s32.totalorder %v182, 48
  %v881 = vsel %vm880, %v877, %v879
  %v882 = vsel %vm880, %v879, %v877
  %s883 = scalar_lea.vmem %s3, 48
  %v884 = vld [vmem:[%s883] sm:$0xff]
  %v885 = vld [vmem:[%s883 + $0x8] sm:$0xff]
  %v886 = vmul.f32 %v882, %v884
  %v887 = vmul.f32 %v881, %v885
  %v888 = vadd.f32 %v886, 0.0
  %v889 = vadd.f32 %v887, 0.0
  %890 = vrot.lane.b32.xlu0 %v833, 47
  %v891 = vpop.permute.xlu0 %890
  %892 = vrot.lane.b32.xlu0 %v834, 47
  %v893 = vpop.permute.xlu0 %892
  %vm894 = vcmp.lt.s32.totalorder %v182, 47
  %v895 = vsel %vm894, %v891, %v893
  %v896 = vsel %vm894, %v893, %v891
  %s897 = scalar_lea.vmem %s3, 64
  %v898 = vld [vmem:[%s897] sm:$0xff]
  %v899 = vld [vmem:[%s897 + $0x8] sm:$0xff]
  %v900 = vmul.f32 %v896, %v898
  %v901 = vmul.f32 %v895, %v899
  %v902 = vadd.f32 %v846, %v900
  %v903 = vadd.f32 %v847, %v901
  %904 = vrot.lane.b32.xlu0 %v833, 46
  %v905 = vpop.permute.xlu0 %904
  %906 = vrot.lane.b32.xlu0 %v834, 46
  %v907 = vpop.permute.xlu0 %906
  %vm908 = vcmp.lt.s32.totalorder %v182, 46
  %v909 = vsel %vm908, %v905, %v907
  %v910 = vsel %vm908, %v907, %v905
  %s911 = scalar_lea.vmem %s3, 80
  %v912 = vld [vmem:[%s911] sm:$0xff]
  %v913 = vld [vmem:[%s911 + $0x8] sm:$0xff]
  %v914 = vmul.f32 %v910, %v912
  %v915 = vmul.f32 %v909, %v913
  %v916 = vadd.f32 %v860, %v914
  %v917 = vadd.f32 %v861, %v915
  %918 = vrot.lane.b32.xlu0 %v833, 45
  %v919 = vpop.permute.xlu0 %918
  %920 = vrot.lane.b32.xlu0 %v834, 45
  %v921 = vpop.permute.xlu0 %920
  %vm922 = vcmp.lt.s32.totalorder %v182, 45
  %v923 = vsel %vm922, %v919, %v921
  %v924 = vsel %vm922, %v921, %v919
  %s925 = scalar_lea.vmem %s3, 96
  %v926 = vld [vmem:[%s925] sm:$0xff]
  %v927 = vld [vmem:[%s925 + $0x8] sm:$0xff]
  %v928 = vmul.f32 %v924, %v926
  %v929 = vmul.f32 %v923, %v927
  %v930 = vadd.f32 %v874, %v928
  %v931 = vadd.f32 %v875, %v929
  %932 = vrot.lane.b32.xlu0 %v833, 35
  %v933 = vpop.permute.xlu0 %932
  %934 = vrot.lane.b32.xlu0 %v834, 35
  %v935 = vpop.permute.xlu0 %934
  %vm936 = vcmp.lt.s32.totalorder %v182, 35
  %v937 = vsel %vm936, %v933, %v935
  %v938 = vsel %vm936, %v935, %v933
  %s939 = scalar_lea.vmem %s3, 112
  %v940 = vld [vmem:[%s939] sm:$0xff]
  %v941 = vld [vmem:[%s939 + $0x8] sm:$0xff]
  %v942 = vmul.f32 %v938, %v940
  %v943 = vmul.f32 %v937, %v941
  %v944 = vadd.f32 %v888, %v942
  %v945 = vadd.f32 %v889, %v943
  %946 = vrot.lane.b32.xlu0 %v833, 34
  %v947 = vpop.permute.xlu0 %946
  %948 = vrot.lane.b32.xlu0 %v834, 34
  %v949 = vpop.permute.xlu0 %948
  %vm950 = vcmp.lt.s32.totalorder %v182, 34
  %v951 = vsel %vm950, %v947, %v949
  %v952 = vsel %vm950, %v949, %v947
  %s953 = scalar_lea.vmem %s3, 128
  %v954 = vld [vmem:[%s953] sm:$0xff]
  %v955 = vld [vmem:[%s953 + $0x8] sm:$0xff]
  %v956 = vmul.f32 %v952, %v954
  %v957 = vmul.f32 %v951, %v955
  %v958 = vadd.f32 %v902, %v956
  %v959 = vadd.f32 %v903, %v957
  %960 = vrot.lane.b32.xlu0 %v833, 33
  %v961 = vpop.permute.xlu0 %960
  %962 = vrot.lane.b32.xlu0 %v834, 33
  %v963 = vpop.permute.xlu0 %962
  %vm964 = vcmp.lt.s32.totalorder %v182, 33
  %v965 = vsel %vm964, %v961, %v963
  %v966 = vsel %vm964, %v963, %v961
  %s967 = scalar_lea.vmem %s3, 144
  %v968 = vld [vmem:[%s967] sm:$0xff]
  %v969 = vld [vmem:[%s967 + $0x8] sm:$0xff]
  %v970 = vmul.f32 %v966, %v968
  %v971 = vmul.f32 %v965, %v969
  %v972 = vadd.f32 %v916, %v970
  %v973 = vadd.f32 %v917, %v971
  %974 = vrot.lane.b32.xlu0 %v833, 32
  %v975 = vpop.permute.xlu0 %974
  %976 = vrot.lane.b32.xlu0 %v834, 32
  %v977 = vpop.permute.xlu0 %976
  %vm978 = vcmp.lt.s32.totalorder %v182, 32
  %v979 = vsel %vm978, %v975, %v977
  %v980 = vsel %vm978, %v977, %v975
  %s981 = scalar_lea.vmem %s3, 160
  %v982 = vld [vmem:[%s981] sm:$0xff]
  %v983 = vld [vmem:[%s981 + $0x8] sm:$0xff]
  %v984 = vmul.f32 %v980, %v982
  %v985 = vmul.f32 %v979, %v983
  %v986 = vadd.f32 %v930, %v984
  %v987 = vadd.f32 %v931, %v985
  %988 = vrot.lane.b32.xlu0 %v833, 31
  %v989 = vpop.permute.xlu0 %988
  %990 = vrot.lane.b32.xlu0 %v834, 31
  %v991 = vpop.permute.xlu0 %990
  %vm992 = vcmp.lt.s32.totalorder %v182, 31
  %v993 = vsel %vm992, %v989, %v991
  %v994 = vsel %vm992, %v991, %v989
  %s995 = scalar_lea.vmem %s3, 176
  %v996 = vld [vmem:[%s995] sm:$0xff]
  %v997 = vld [vmem:[%s995 + $0x8] sm:$0xff]
  %v998 = vmul.f32 %v994, %v996
  %v999 = vmul.f32 %v993, %v997
  %v1000 = vadd.f32 %v944, %v998
  %v1001 = vadd.f32 %v945, %v999
  %1002 = vrot.lane.b32.xlu0 %v833, 30
  %v1003 = vpop.permute.xlu0 %1002
  %1004 = vrot.lane.b32.xlu0 %v834, 30
  %v1005 = vpop.permute.xlu0 %1004
  %vm1006 = vcmp.lt.s32.totalorder %v182, 30
  %v1007 = vsel %vm1006, %v1003, %v1005
  %v1008 = vsel %vm1006, %v1005, %v1003
  %s1009 = scalar_lea.vmem %s3, 192
  %v1010 = vld [vmem:[%s1009] sm:$0xff]
  %v1011 = vld [vmem:[%s1009 + $0x8] sm:$0xff]
  %v1012 = vmul.f32 %v1008, %v1010
  %v1013 = vmul.f32 %v1007, %v1011
  %v1014 = vadd.f32 %v958, %v1012
  %v1015 = vadd.f32 %v959, %v1013
  %1016 = vrot.lane.b32.xlu0 %v833, 29
  %v1017 = vpop.permute.xlu0 %1016
  %1018 = vrot.lane.b32.xlu0 %v834, 29
  %v1019 = vpop.permute.xlu0 %1018
  %vm1020 = vcmp.lt.s32.totalorder %v182, 29
  %v1021 = vsel %vm1020, %v1017, %v1019
  %v1022 = vsel %vm1020, %v1019, %v1017
  %s1023 = scalar_lea.vmem %s3, 208
  %v1024 = vld [vmem:[%s1023] sm:$0xff]
  %v1025 = vld [vmem:[%s1023 + $0x8] sm:$0xff]
  %v1026 = vmul.f32 %v1022, %v1024
  %v1027 = vmul.f32 %v1021, %v1025
  %v1028 = vadd.f32 %v972, %v1026
  %v1029 = vadd.f32 %v973, %v1027
  %1030 = vrot.lane.b32.xlu0 %v833, 19
  %v1031 = vpop.permute.xlu0 %1030
  %1032 = vrot.lane.b32.xlu0 %v834, 19
  %v1033 = vpop.permute.xlu0 %1032
  %vm1034 = vcmp.lt.s32.totalorder %v182, 19
  %v1035 = vsel %vm1034, %v1031, %v1033
  %v1036 = vsel %vm1034, %v1033, %v1031
  %s1037 = scalar_lea.vmem %s3, 224
  %v1038 = vld [vmem:[%s1037] sm:$0xff]
  %v1039 = vld [vmem:[%s1037 + $0x8] sm:$0xff]
  %v1040 = vmul.f32 %v1036, %v1038
  %v1041 = vmul.f32 %v1035, %v1039
  %v1042 = vadd.f32 %v986, %v1040
  %v1043 = vadd.f32 %v987, %v1041
  %1044 = vrot.lane.b32.xlu0 %v833, 18
  %v1045 = vpop.permute.xlu0 %1044
  %1046 = vrot.lane.b32.xlu0 %v834, 18
  %v1047 = vpop.permute.xlu0 %1046
  %vm1048 = vcmp.lt.s32.totalorder %v182, 18
  %v1049 = vsel %vm1048, %v1045, %v1047
  %v1050 = vsel %vm1048, %v1047, %v1045
  %s1051 = scalar_lea.vmem %s3, 240
  %v1052 = vld [vmem:[%s1051] sm:$0xff]
  %v1053 = vld [vmem:[%s1051 + $0x8] sm:$0xff]
  %v1054 = vmul.f32 %v1050, %v1052
  %v1055 = vmul.f32 %v1049, %v1053
  %v1056 = vadd.f32 %v1000, %v1054
  %v1057 = vadd.f32 %v1001, %v1055
  %1058 = vrot.lane.b32.xlu0 %v833, 17
  %v1059 = vpop.permute.xlu0 %1058
  %1060 = vrot.lane.b32.xlu0 %v834, 17
  %v1061 = vpop.permute.xlu0 %1060
  %vm1062 = vcmp.lt.s32.totalorder %v182, 17
  %v1063 = vsel %vm1062, %v1059, %v1061
  %v1064 = vsel %vm1062, %v1061, %v1059
  %s1065 = scalar_lea.vmem %s3, 256
  %v1066 = vld [vmem:[%s1065] sm:$0xff]
  %v1067 = vld [vmem:[%s1065 + $0x8] sm:$0xff]
  %v1068 = vmul.f32 %v1064, %v1066
  %v1069 = vmul.f32 %v1063, %v1067
  %v1070 = vadd.f32 %v1014, %v1068
  %v1071 = vadd.f32 %v1015, %v1069
  %1072 = vrot.lane.b32.xlu0 %v833, 16
  %v1073 = vpop.permute.xlu0 %1072
  %1074 = vrot.lane.b32.xlu0 %v834, 16
  %v1075 = vpop.permute.xlu0 %1074
  %vm1076 = vcmp.lt.s32.totalorder %v182, 16
  %v1077 = vsel %vm1076, %v1073, %v1075
  %v1078 = vsel %vm1076, %v1075, %v1073
  %s1079 = scalar_lea.vmem %s3, 272
  %v1080 = vld [vmem:[%s1079] sm:$0xff]
  %v1081 = vld [vmem:[%s1079 + $0x8] sm:$0xff]
  %v1082 = vmul.f32 %v1078, %v1080
  %v1083 = vmul.f32 %v1077, %v1081
  %v1084 = vadd.f32 %v1028, %v1082
  %v1085 = vadd.f32 %v1029, %v1083
  %1086 = vrot.lane.b32.xlu0 %v833, 15
  %v1087 = vpop.permute.xlu0 %1086
  %1088 = vrot.lane.b32.xlu0 %v834, 15
  %v1089 = vpop.permute.xlu0 %1088
  %vm1090 = vcmp.lt.s32.totalorder %v182, 15
  %v1091 = vsel %vm1090, %v1087, %v1089
  %v1092 = vsel %vm1090, %v1089, %v1087
  %s1093 = scalar_lea.vmem %s3, 288
  %v1094 = vld [vmem:[%s1093] sm:$0xff]
  %v1095 = vld [vmem:[%s1093 + $0x8] sm:$0xff]
  %v1096 = vmul.f32 %v1092, %v1094
  %v1097 = vmul.f32 %v1091, %v1095
  %v1098 = vadd.f32 %v1042, %v1096
  %v1099 = vadd.f32 %v1043, %v1097
  %1100 = vrot.lane.b32.xlu0 %v833, 14
  %v1101 = vpop.permute.xlu0 %1100
  %1102 = vrot.lane.b32.xlu0 %v834, 14
  %v1103 = vpop.permute.xlu0 %1102
  %vm1104 = vcmp.lt.s32.totalorder %v182, 14
  %v1105 = vsel %vm1104, %v1101, %v1103
  %v1106 = vsel %vm1104, %v1103, %v1101
  %s1107 = scalar_lea.vmem %s3, 304
  %v1108 = vld [vmem:[%s1107] sm:$0xff]
  %v1109 = vld [vmem:[%s1107 + $0x8] sm:$0xff]
  %v1110 = vmul.f32 %v1106, %v1108
  %v1111 = vmul.f32 %v1105, %v1109
  %v1112 = vadd.f32 %v1056, %v1110
  %v1113 = vadd.f32 %v1057, %v1111
  %1114 = vrot.lane.b32.xlu0 %v833, 13
  %v1115 = vpop.permute.xlu0 %1114
  %1116 = vrot.lane.b32.xlu0 %v834, 13
  %v1117 = vpop.permute.xlu0 %1116
  %vm1118 = vcmp.lt.s32.totalorder %v182, 13
  %v1119 = vsel %vm1118, %v1115, %v1117
  %v1120 = vsel %vm1118, %v1117, %v1115
  %s1121 = scalar_lea.vmem %s3, 320
  %v1122 = vld [vmem:[%s1121] sm:$0xff]
  %v1123 = vld [vmem:[%s1121 + $0x8] sm:$0xff]
  %v1124 = vmul.f32 %v1120, %v1122
  %v1125 = vmul.f32 %v1119, %v1123
  %v1126 = vadd.f32 %v1070, %v1124
  %v1127 = vadd.f32 %v1071, %v1125
  %1128 = vrot.lane.b32.xlu0 %v833, 3
  %v1129 = vpop.permute.xlu0 %1128
  %1130 = vrot.lane.b32.xlu0 %v834, 3
  %v1131 = vpop.permute.xlu0 %1130
  %vm1132 = vcmp.lt.s32.totalorder %v182, 3
  %v1133 = vsel %vm1132, %v1129, %v1131
  %v1134 = vsel %vm1132, %v1131, %v1129
  %s1135 = scalar_lea.vmem %s3, 336
  %v1136 = vld [vmem:[%s1135] sm:$0xff]
  %v1137 = vld [vmem:[%s1135 + $0x8] sm:$0xff]
  %v1138 = vmul.f32 %v1134, %v1136
  %v1139 = vmul.f32 %v1133, %v1137
  %v1140 = vadd.f32 %v1084, %v1138
  %v1141 = vadd.f32 %v1085, %v1139
  %1142 = vrot.lane.b32.xlu0 %v833, 2
  %v1143 = vpop.permute.xlu0 %1142
  %1144 = vrot.lane.b32.xlu0 %v834, 2
  %v1145 = vpop.permute.xlu0 %1144
  %vm1146 = vcmp.lt.s32.totalorder %v182, 2
  %v1147 = vsel %vm1146, %v1143, %v1145
  %v1148 = vsel %vm1146, %v1145, %v1143
  %s1149 = scalar_lea.vmem %s3, 352
  %v1150 = vld [vmem:[%s1149] sm:$0xff]
  %v1151 = vld [vmem:[%s1149 + $0x8] sm:$0xff]
  %v1152 = vmul.f32 %v1148, %v1150
  %v1153 = vmul.f32 %v1147, %v1151
  %v1154 = vadd.f32 %v1098, %v1152
  %v1155 = vadd.f32 %v1099, %v1153
  %1156 = vrot.lane.b32.xlu0 %v833, 1
  %v1157 = vpop.permute.xlu0 %1156
  %1158 = vrot.lane.b32.xlu0 %v834, 1
  %v1159 = vpop.permute.xlu0 %1158
  %vm1160 = vcmp.lt.s32.totalorder %v182, 1
  %v1161 = vsel %vm1160, %v1157, %v1159
  %v1162 = vsel %vm1160, %v1159, %v1157
  %s1163 = scalar_lea.vmem %s3, 368
  %v1164 = vld [vmem:[%s1163] sm:$0xff]
  %v1165 = vld [vmem:[%s1163 + $0x8] sm:$0xff]
  %v1166 = vmul.f32 %v1162, %v1164
  %v1167 = vmul.f32 %v1161, %v1165
  %v1168 = vadd.f32 %v1112, %v1166
  %v1169 = vadd.f32 %v1113, %v1167
  %s1170 = scalar_lea.vmem %s3, 384
  %v1171 = vld [vmem:[%s1170] sm:$0xff]
  %v1172 = vld [vmem:[%s1170 + $0x8] sm:$0xff]
  %v1173 = vmul.f32 %v833, %v1171
  %v1174 = vmul.f32 %v834, %v1172
  %v1175 = vadd.f32 %v1126, %v1173
  %v1176 = vadd.f32 %v1127, %v1174
  %1177 = vrot.lane.b32.xlu0 %v833, 127
  %v1178 = vpop.permute.xlu0 %1177
  %1179 = vrot.lane.b32.xlu0 %v834, 127
  %v1180 = vpop.permute.xlu0 %1179
  %vm1181 = vcmp.lt.s32.totalorder %v182, 127
  %v1182 = vsel %vm1181, %v1178, %v1180
  %v1183 = vsel %vm1181, %v1180, %v1178
  %s1184 = scalar_lea.vmem %s3, 400
  %v1185 = vld [vmem:[%s1184] sm:$0xff]
  %v1186 = vld [vmem:[%s1184 + $0x8] sm:$0xff]
  %v1187 = vmul.f32 %v1182, %v1185
  %v1188 = vmul.f32 %v1183, %v1186
  %v1189 = vadd.f32 %v1140, %v1187
  %v1190 = vadd.f32 %v1141, %v1188
  %1191 = vrot.lane.b32.xlu0 %v833, 126
  %v1192 = vpop.permute.xlu0 %1191
  %1193 = vrot.lane.b32.xlu0 %v834, 126
  %v1194 = vpop.permute.xlu0 %1193
  %vm1195 = vcmp.lt.s32.totalorder %v182, 126
  %v1196 = vsel %vm1195, %v1192, %v1194
  %v1197 = vsel %vm1195, %v1194, %v1192
  %s1198 = scalar_lea.vmem %s3, 416
  %v1199 = vld [vmem:[%s1198] sm:$0xff]
  %v1200 = vld [vmem:[%s1198 + $0x8] sm:$0xff]
  %v1201 = vmul.f32 %v1196, %v1199
  %v1202 = vmul.f32 %v1197, %v1200
  %v1203 = vadd.f32 %v1154, %v1201
  %v1204 = vadd.f32 %v1155, %v1202
  %1205 = vrot.lane.b32.xlu0 %v833, 125
  %v1206 = vpop.permute.xlu0 %1205
  %1207 = vrot.lane.b32.xlu0 %v834, 125
  %v1208 = vpop.permute.xlu0 %1207
  %vm1209 = vcmp.lt.s32.totalorder %v182, 125
  %v1210 = vsel %vm1209, %v1206, %v1208
  %v1211 = vsel %vm1209, %v1208, %v1206
  %s1212 = scalar_lea.vmem %s3, 432
  %v1213 = vld [vmem:[%s1212] sm:$0xff]
  %v1214 = vld [vmem:[%s1212 + $0x8] sm:$0xff]
  %v1215 = vmul.f32 %v1210, %v1213
  %v1216 = vmul.f32 %v1211, %v1214
  %v1217 = vadd.f32 %v1168, %v1215
  %v1218 = vadd.f32 %v1169, %v1216
  %1219 = vrot.lane.b32.xlu0 %v833, 115
  %v1220 = vpop.permute.xlu0 %1219
  %1221 = vrot.lane.b32.xlu0 %v834, 115
  %v1222 = vpop.permute.xlu0 %1221
  %vm1223 = vcmp.lt.s32.totalorder %v182, 115
  %v1224 = vsel %vm1223, %v1220, %v1222
  %v1225 = vsel %vm1223, %v1222, %v1220
  %s1226 = scalar_lea.vmem %s3, 448
  %v1227 = vld [vmem:[%s1226] sm:$0xff]
  %v1228 = vld [vmem:[%s1226 + $0x8] sm:$0xff]
  %v1229 = vmul.f32 %v1224, %v1227
  %v1230 = vmul.f32 %v1225, %v1228
  %v1231 = vadd.f32 %v1175, %v1229
  %v1232 = vadd.f32 %v1176, %v1230
  %1233 = vrot.lane.b32.xlu0 %v833, 114
  %v1234 = vpop.permute.xlu0 %1233
  %1235 = vrot.lane.b32.xlu0 %v834, 114
  %v1236 = vpop.permute.xlu0 %1235
  %vm1237 = vcmp.lt.s32.totalorder %v182, 114
  %v1238 = vsel %vm1237, %v1234, %v1236
  %v1239 = vsel %vm1237, %v1236, %v1234
  %s1240 = scalar_lea.vmem %s3, 464
  %v1241 = vld [vmem:[%s1240] sm:$0xff]
  %v1242 = vld [vmem:[%s1240 + $0x8] sm:$0xff]
  %v1243 = vmul.f32 %v1238, %v1241
  %v1244 = vmul.f32 %v1239, %v1242
  %v1245 = vadd.f32 %v1189, %v1243
  %v1246 = vadd.f32 %v1190, %v1244
  %1247 = vrot.lane.b32.xlu0 %v833, 113
  %v1248 = vpop.permute.xlu0 %1247
  %1249 = vrot.lane.b32.xlu0 %v834, 113
  %v1250 = vpop.permute.xlu0 %1249
  %vm1251 = vcmp.lt.s32.totalorder %v182, 113
  %v1252 = vsel %vm1251, %v1248, %v1250
  %v1253 = vsel %vm1251, %v1250, %v1248
  %s1254 = scalar_lea.vmem %s3, 480
  %v1255 = vld [vmem:[%s1254] sm:$0xff]
  %v1256 = vld [vmem:[%s1254 + $0x8] sm:$0xff]
  %v1257 = vmul.f32 %v1252, %v1255
  %v1258 = vmul.f32 %v1253, %v1256
  %v1259 = vadd.f32 %v1203, %v1257
  %v1260 = vadd.f32 %v1204, %v1258
  %1261 = vrot.lane.b32.xlu0 %v833, 112
  %v1262 = vpop.permute.xlu0 %1261
  %1263 = vrot.lane.b32.xlu0 %v834, 112
  %v1264 = vpop.permute.xlu0 %1263
  %vm1265 = vcmp.lt.s32.totalorder %v182, 112
  %v1266 = vsel %vm1265, %v1262, %v1264
  %v1267 = vsel %vm1265, %v1264, %v1262
  %s1268 = scalar_lea.vmem %s3, 496
  %v1269 = vld [vmem:[%s1268] sm:$0xff]
  %v1270 = vld [vmem:[%s1268 + $0x8] sm:$0xff]
  %v1271 = vmul.f32 %v1266, %v1269
  %v1272 = vmul.f32 %v1267, %v1270
  %v1273 = vadd.f32 %v1217, %v1271
  %v1274 = vadd.f32 %v1218, %v1272
  %1275 = vrot.lane.b32.xlu0 %v833, 111
  %v1276 = vpop.permute.xlu0 %1275
  %1277 = vrot.lane.b32.xlu0 %v834, 111
  %v1278 = vpop.permute.xlu0 %1277
  %vm1279 = vcmp.lt.s32.totalorder %v182, 111
  %v1280 = vsel %vm1279, %v1276, %v1278
  %v1281 = vsel %vm1279, %v1278, %v1276
  %s1282 = scalar_lea.vmem %s3, 512
  %v1283 = vld [vmem:[%s1282] sm:$0xff]
  %v1284 = vld [vmem:[%s1282 + $0x8] sm:$0xff]
  %v1285 = vmul.f32 %v1280, %v1283
  %v1286 = vmul.f32 %v1281, %v1284
  %v1287 = vadd.f32 %v1231, %v1285
  %v1288 = vadd.f32 %v1232, %v1286
  %1289 = vrot.lane.b32.xlu0 %v833, 110
  %v1290 = vpop.permute.xlu0 %1289
  %1291 = vrot.lane.b32.xlu0 %v834, 110
  %v1292 = vpop.permute.xlu0 %1291
  %vm1293 = vcmp.lt.s32.totalorder %v182, 110
  %v1294 = vsel %vm1293, %v1290, %v1292
  %v1295 = vsel %vm1293, %v1292, %v1290
  %s1296 = scalar_lea.vmem %s3, 528
  %v1297 = vld [vmem:[%s1296] sm:$0xff]
  %v1298 = vld [vmem:[%s1296 + $0x8] sm:$0xff]
  %v1299 = vmul.f32 %v1294, %v1297
  %v1300 = vmul.f32 %v1295, %v1298
  %v1301 = vadd.f32 %v1245, %v1299
  %v1302 = vadd.f32 %v1246, %v1300
  %1303 = vrot.lane.b32.xlu0 %v833, 109
  %v1304 = vpop.permute.xlu0 %1303
  %1305 = vrot.lane.b32.xlu0 %v834, 109
  %v1306 = vpop.permute.xlu0 %1305
  %vm1307 = vcmp.lt.s32.totalorder %v182, 109
  %v1308 = vsel %vm1307, %v1304, %v1306
  %v1309 = vsel %vm1307, %v1306, %v1304
  %s1310 = scalar_lea.vmem %s3, 544
  %v1311 = vld [vmem:[%s1310] sm:$0xff]
  %v1312 = vld [vmem:[%s1310 + $0x8] sm:$0xff]
  %v1313 = vmul.f32 %v1308, %v1311
  %v1314 = vmul.f32 %v1309, %v1312
  %v1315 = vadd.f32 %v1259, %v1313
  %v1316 = vadd.f32 %v1260, %v1314
  %1317 = vrot.lane.b32.xlu0 %v833, 99
  %v1318 = vpop.permute.xlu0 %1317
  %1319 = vrot.lane.b32.xlu0 %v834, 99
  %v1320 = vpop.permute.xlu0 %1319
  %vm1321 = vcmp.lt.s32.totalorder %v182, 99
  %v1322 = vsel %vm1321, %v1318, %v1320
  %v1323 = vsel %vm1321, %v1320, %v1318
  %s1324 = scalar_lea.vmem %s3, 560
  %v1325 = vld [vmem:[%s1324] sm:$0xff]
  %v1326 = vld [vmem:[%s1324 + $0x8] sm:$0xff]
  %v1327 = vmul.f32 %v1322, %v1325
  %v1328 = vmul.f32 %v1323, %v1326
  %v1329 = vadd.f32 %v1273, %v1327
  %v1330 = vadd.f32 %v1274, %v1328
  %1331 = vrot.lane.b32.xlu0 %v833, 98
  %v1332 = vpop.permute.xlu0 %1331
  %1333 = vrot.lane.b32.xlu0 %v834, 98
  %v1334 = vpop.permute.xlu0 %1333
  %vm1335 = vcmp.lt.s32.totalorder %v182, 98
  %v1336 = vsel %vm1335, %v1332, %v1334
  %v1337 = vsel %vm1335, %v1334, %v1332
  %s1338 = scalar_lea.vmem %s3, 576
  %v1339 = vld [vmem:[%s1338] sm:$0xff]
  %v1340 = vld [vmem:[%s1338 + $0x8] sm:$0xff]
  %v1341 = vmul.f32 %v1336, %v1339
  %v1342 = vmul.f32 %v1337, %v1340
  %v1343 = vadd.f32 %v1287, %v1341
  %v1344 = vadd.f32 %v1288, %v1342
  %1345 = vrot.lane.b32.xlu0 %v833, 97
  %v1346 = vpop.permute.xlu0 %1345
  %1347 = vrot.lane.b32.xlu0 %v834, 97
  %v1348 = vpop.permute.xlu0 %1347
  %vm1349 = vcmp.lt.s32.totalorder %v182, 97
  %v1350 = vsel %vm1349, %v1346, %v1348
  %v1351 = vsel %vm1349, %v1348, %v1346
  %s1352 = scalar_lea.vmem %s3, 592
  %v1353 = vld [vmem:[%s1352] sm:$0xff]
  %v1354 = vld [vmem:[%s1352 + $0x8] sm:$0xff]
  %v1355 = vmul.f32 %v1350, %v1353
  %v1356 = vmul.f32 %v1351, %v1354
  %v1357 = vadd.f32 %v1301, %v1355
  %v1358 = vadd.f32 %v1302, %v1356
  %1359 = vrot.lane.b32.xlu0 %v833, 96
  %v1360 = vpop.permute.xlu0 %1359
  %1361 = vrot.lane.b32.xlu0 %v834, 96
  %v1362 = vpop.permute.xlu0 %1361
  %vm1363 = vcmp.lt.s32.totalorder %v182, 96
  %v1364 = vsel %vm1363, %v1360, %v1362
  %v1365 = vsel %vm1363, %v1362, %v1360
  %s1366 = scalar_lea.vmem %s3, 608
  %v1367 = vld [vmem:[%s1366] sm:$0xff]
  %v1368 = vld [vmem:[%s1366 + $0x8] sm:$0xff]
  %v1369 = vmul.f32 %v1364, %v1367
  %v1370 = vmul.f32 %v1365, %v1368
  %v1371 = vadd.f32 %v1315, %v1369
  %v1372 = vadd.f32 %v1316, %v1370
  %1373 = vrot.lane.b32.xlu0 %v833, 95
  %v1374 = vpop.permute.xlu0 %1373
  %1375 = vrot.lane.b32.xlu0 %v834, 95
  %v1376 = vpop.permute.xlu0 %1375
  %vm1377 = vcmp.lt.s32.totalorder %v182, 95
  %v1378 = vsel %vm1377, %v1374, %v1376
  %v1379 = vsel %vm1377, %v1376, %v1374
  %s1380 = scalar_lea.vmem %s3, 624
  %v1381 = vld [vmem:[%s1380] sm:$0xff]
  %v1382 = vld [vmem:[%s1380 + $0x8] sm:$0xff]
  %v1383 = vmul.f32 %v1378, %v1381
  %v1384 = vmul.f32 %v1379, %v1382
  %v1385 = vadd.f32 %v1329, %v1383
  %v1386 = vadd.f32 %v1330, %v1384
  %1387 = vrot.lane.b32.xlu0 %v833, 94
  %v1388 = vpop.permute.xlu0 %1387
  %1389 = vrot.lane.b32.xlu0 %v834, 94
  %v1390 = vpop.permute.xlu0 %1389
  %vm1391 = vcmp.lt.s32.totalorder %v182, 94
  %v1392 = vsel %vm1391, %v1388, %v1390
  %v1393 = vsel %vm1391, %v1390, %v1388
  %s1394 = scalar_lea.vmem %s3, 640
  %v1395 = vld [vmem:[%s1394] sm:$0xff]
  %v1396 = vld [vmem:[%s1394 + $0x8] sm:$0xff]
  %v1397 = vmul.f32 %v1392, %v1395
  %v1398 = vmul.f32 %v1393, %v1396
  %v1399 = vadd.f32 %v1343, %v1397
  %v1400 = vadd.f32 %v1344, %v1398
  %1401 = vrot.lane.b32.xlu0 %v833, 93
  %v1402 = vpop.permute.xlu0 %1401
  %1403 = vrot.lane.b32.xlu0 %v834, 93
  %v1404 = vpop.permute.xlu0 %1403
  %vm1405 = vcmp.lt.s32.totalorder %v182, 93
  %v1406 = vsel %vm1405, %v1402, %v1404
  %v1407 = vsel %vm1405, %v1404, %v1402
  %s1408 = scalar_lea.vmem %s3, 656
  %v1409 = vld [vmem:[%s1408] sm:$0xff]
  %v1410 = vld [vmem:[%s1408 + $0x8] sm:$0xff]
  %v1411 = vmul.f32 %v1406, %v1409
  %v1412 = vmul.f32 %v1407, %v1410
  %v1413 = vadd.f32 %v1357, %v1411
  %v1414 = vadd.f32 %v1358, %v1412
  %1415 = vrot.lane.b32.xlu0 %v833, 83
  %v1416 = vpop.permute.xlu0 %1415
  %1417 = vrot.lane.b32.xlu0 %v834, 83
  %v1418 = vpop.permute.xlu0 %1417
  %vm1419 = vcmp.lt.s32.totalorder %v182, 83
  %v1420 = vsel %vm1419, %v1416, %v1418
  %v1421 = vsel %vm1419, %v1418, %v1416
  %s1422 = scalar_lea.vmem %s3, 672
  %v1423 = vld [vmem:[%s1422] sm:$0xff]
  %v1424 = vld [vmem:[%s1422 + $0x8] sm:$0xff]
  %v1425 = vmul.f32 %v1420, %v1423
  %v1426 = vmul.f32 %v1421, %v1424
  %v1427 = vadd.f32 %v1371, %v1425
  %v1428 = vadd.f32 %v1372, %v1426
  %1429 = vrot.lane.b32.xlu0 %v833, 82
  %v1430 = vpop.permute.xlu0 %1429
  %1431 = vrot.lane.b32.xlu0 %v834, 82
  %v1432 = vpop.permute.xlu0 %1431
  %vm1433 = vcmp.lt.s32.totalorder %v182, 82
  %v1434 = vsel %vm1433, %v1430, %v1432
  %v1435 = vsel %vm1433, %v1432, %v1430
  %s1436 = scalar_lea.vmem %s3, 688
  %v1437 = vld [vmem:[%s1436] sm:$0xff]
  %v1438 = vld [vmem:[%s1436 + $0x8] sm:$0xff]
  %v1439 = vmul.f32 %v1434, %v1437
  %v1440 = vmul.f32 %v1435, %v1438
  %v1441 = vadd.f32 %v1385, %v1439
  %v1442 = vadd.f32 %v1386, %v1440
  %1443 = vrot.lane.b32.xlu0 %v833, 81
  %v1444 = vpop.permute.xlu0 %1443
  %1445 = vrot.lane.b32.xlu0 %v834, 81
  %v1446 = vpop.permute.xlu0 %1445
  %vm1447 = vcmp.lt.s32.totalorder %v182, 81
  %v1448 = vsel %vm1447, %v1444, %v1446
  %v1449 = vsel %vm1447, %v1446, %v1444
  %s1450 = scalar_lea.vmem %s3, 704
  %v1451 = vld [vmem:[%s1450] sm:$0xff]
  %v1452 = vld [vmem:[%s1450 + $0x8] sm:$0xff]
  %v1453 = vmul.f32 %v1448, %v1451
  %v1454 = vmul.f32 %v1449, %v1452
  %v1455 = vadd.f32 %v1399, %v1453
  %v1456 = vadd.f32 %v1400, %v1454
  %1457 = vrot.lane.b32.xlu0 %v833, 80
  %v1458 = vpop.permute.xlu0 %1457
  %1459 = vrot.lane.b32.xlu0 %v834, 80
  %v1460 = vpop.permute.xlu0 %1459
  %vm1461 = vcmp.lt.s32.totalorder %v182, 80
  %v1462 = vsel %vm1461, %v1458, %v1460
  %v1463 = vsel %vm1461, %v1460, %v1458
  %s1464 = scalar_lea.vmem %s3, 720
  %v1465 = vld [vmem:[%s1464] sm:$0xff]
  %v1466 = vld [vmem:[%s1464 + $0x8] sm:$0xff]
  %v1467 = vmul.f32 %v1462, %v1465
  %v1468 = vmul.f32 %v1463, %v1466
  %v1469 = vadd.f32 %v1413, %v1467
  %v1470 = vadd.f32 %v1414, %v1468
  %1471 = vrot.lane.b32.xlu0 %v833, 79
  %v1472 = vpop.permute.xlu0 %1471
  %1473 = vrot.lane.b32.xlu0 %v834, 79
  %v1474 = vpop.permute.xlu0 %1473
  %vm1475 = vcmp.lt.s32.totalorder %v182, 79
  %v1476 = vsel %vm1475, %v1472, %v1474
  %v1477 = vsel %vm1475, %v1474, %v1472
  %s1478 = scalar_lea.vmem %s3, 736
  %v1479 = vld [vmem:[%s1478] sm:$0xff]
  %v1480 = vld [vmem:[%s1478 + $0x8] sm:$0xff]
  %v1481 = vmul.f32 %v1476, %v1479
  %v1482 = vmul.f32 %v1477, %v1480
  %v1483 = vadd.f32 %v1427, %v1481
  %v1484 = vadd.f32 %v1428, %v1482
  %1485 = vrot.lane.b32.xlu0 %v833, 78
  %v1486 = vpop.permute.xlu0 %1485
  %1487 = vrot.lane.b32.xlu0 %v834, 78
  %v1488 = vpop.permute.xlu0 %1487
  %vm1489 = vcmp.lt.s32.totalorder %v182, 78
  %v1490 = vsel %vm1489, %v1486, %v1488
  %v1491 = vsel %vm1489, %v1488, %v1486
  %s1492 = scalar_lea.vmem %s3, 752
  %v1493 = vld [vmem:[%s1492] sm:$0xff]
  %v1494 = vld [vmem:[%s1492 + $0x8] sm:$0xff]
  %v1495 = vmul.f32 %v1490, %v1493
  %v1496 = vmul.f32 %v1491, %v1494
  %v1497 = vadd.f32 %v1441, %v1495
  %v1498 = vadd.f32 %v1442, %v1496
  %1499 = vrot.lane.b32.xlu0 %v833, 77
  %v1500 = vpop.permute.xlu0 %1499
  %1501 = vrot.lane.b32.xlu0 %v834, 77
  %v1502 = vpop.permute.xlu0 %1501
  %vm1503 = vcmp.lt.s32.totalorder %v182, 77
  %v1504 = vsel %vm1503, %v1500, %v1502
  %v1505 = vsel %vm1503, %v1502, %v1500
  %s1506 = scalar_lea.vmem %s3, 768
  %v1507 = vld [vmem:[%s1506] sm:$0xff]
  %v1508 = vld [vmem:[%s1506 + $0x8] sm:$0xff]
  %v1509 = vmul.f32 %v1504, %v1507
  %v1510 = vmul.f32 %v1505, %v1508
  %v1511 = vadd.f32 %v1455, %v1509
  %v1512 = vadd.f32 %v1456, %v1510
  %v1513 = vadd.f32 %v1511, %v1469
  %v1514 = vadd.f32 %v1512, %v1470
  %v1515 = vadd.f32 %v1483, %v1497
  %v1516 = vadd.f32 %v1484, %v1498
  %v1517 = vadd.f32 %v1513, %v1515
  %v1518 = vadd.f32 %v1514, %v1516
  %v1521 = vrot.slane %v1517, 4
  %v1522 = vrot.slane %v1518, 4
  %v1525 = vadd.f32 %v1517, %v1521
  %v1526 = vadd.f32 %v1518, %v1522
  %s1527 = sld [smem:[#allocation2]]
  %v1528 = vstv %s1527
  %v1529 = vadd.f32 %v1525, %v1528
  %v1530 = vadd.f32 %v1526, %v1528
  %v1531 = vxor.u32 %v1529, 2147483648
  %v1532 = vxor.u32 %v1530, 2147483648
  %v1533 = vmul.f32 %v1531, 1.442695
  %v1534 = vpow.pop %v1533
  %v1535 = vmul.f32 %v1532, 1.442695
  %v1536 = vpow.pop %v1535
  %v1537 = vadd.f32 %v1534, 1.0
  %v1538 = vadd.f32 %v1536, 1.0
  %v1539 = vrcp.pop %v1537
  %v1540 = vmul.f32 1.0, %v1539
  %v1541 = vrcp.pop %v1538
  %v1542 = vmul.f32 1.0, %v1541
  %v1545 = vcombine.low %v1540, %v1542
  %v1547 = vunpack.c.l.s4 1966171168
  %v1548 = vunpack.c.0.s8 %v1547
  %v1549 = vlaneseq
  %v1550 = vshrl.u32 %v1549, 7
  %v1551 = vsub.s32 %v1548, %v1550
  %v1552 = vrot.slane %v1545, %v1551
  %v1553 = vcombine.high %v1552, %v1552
  %v1555 = vunpack.c.l.s4 1966171168
  %v1556 = vunpack.c.0.s8 %v1555
  %v1557 = vlaneseq
  %v1558 = vshrl.u32 %v1557, 7
  %v1559 = vsub.s32 %v1556, %v1558
  %v1560 = vrot.slane %v1552, %v1559
  %v1562 = vunpack.c.l.s4 1966171168
  %v1563 = vunpack.c.0.s8 %v1562
  %v1564 = vlaneseq
  %v1565 = vshrl.u32 %v1564, 7
  %v1566 = vsub.s32 %v1563, %v1565
  %v1567 = vrot.slane %v1553, %v1566
  %v1568 = vcombine.high %v1560, %v1560
  %v1569 = vcombine.high %v1567, %v1567
  %v1570 = vlaneseq
  %v1571 = vshrl.u32 %v1570, 7
  %v1572 = vsub.s32 0, %v1571
  %v1573 = vrot.slane %v1560, %v1572
  %v1574 = vlaneseq
  %v1575 = vshrl.u32 %v1574, 7
  %v1576 = vsub.s32 1, %v1575
  %v1577 = vrot.slane %v1560, %v1576
  %v1578 = vlaneseq
  %v1579 = vshrl.u32 %v1578, 7
  %v1580 = vsub.s32 0, %v1579
  %v1581 = vrot.slane %v1567, %v1580
  %v1582 = vlaneseq
  %v1583 = vshrl.u32 %v1582, 7
  %v1584 = vsub.s32 1, %v1583
  %v1585 = vrot.slane %v1567, %v1584
  %v1586 = vlaneseq
  %v1587 = vshrl.u32 %v1586, 7
  %v1588 = vsub.s32 0, %v1587
  %v1589 = vrot.slane %v1568, %v1588
  %v1590 = vlaneseq
  %v1591 = vshrl.u32 %v1590, 7
  %v1592 = vsub.s32 1, %v1591
  %v1593 = vrot.slane %v1568, %v1592
  %v1594 = vlaneseq
  %v1595 = vshrl.u32 %v1594, 7
  %v1596 = vsub.s32 0, %v1595
  %v1597 = vrot.slane %v1569, %v1596
  %v1598 = vlaneseq
  %v1599 = vshrl.u32 %v1598, 7
  %v1600 = vsub.s32 1, %v1599
  %v1601 = vrot.slane %v1569, %v1600
  %v1610 = vmul.f32 %v617, %v1573
  %v1611 = vmul.f32 %v618, %v1577
  %v1612 = vmul.f32 %v619, %v1573
  %v1613 = vmul.f32 %v620, %v1577
  %v1614 = vmul.f32 %v621, %v1573
  %v1615 = vmul.f32 %v622, %v1577
  %v1616 = vmul.f32 %v623, %v1573
  %v1617 = vmul.f32 %v624, %v1577
  %v1618 = vmul.f32 %v625, %v1581
  %v1619 = vmul.f32 %v626, %v1585
  %v1620 = vmul.f32 %v627, %v1581
  %v1621 = vmul.f32 %v628, %v1585
  %v1622 = vmul.f32 %v629, %v1581
  %v1623 = vmul.f32 %v630, %v1585
  %v1624 = vmul.f32 %v631, %v1581
  %v1625 = vmul.f32 %v632, %v1585
  %v1626 = vmul.f32 %v633, %v1589
  %v1627 = vmul.f32 %v634, %v1593
  %v1628 = vmul.f32 %v635, %v1589
  %v1629 = vmul.f32 %v636, %v1593
  %v1630 = vmul.f32 %v637, %v1589
  %v1631 = vmul.f32 %v638, %v1593
  %v1632 = vmul.f32 %v639, %v1589
  %v1633 = vmul.f32 %v640, %v1593
  %v1634 = vmul.f32 %v641, %v1597
  %v1635 = vmul.f32 %v642, %v1601
  %v1636 = vmul.f32 %v643, %v1597
  %v1637 = vmul.f32 %v644, %v1601
  %v1638 = vmul.f32 %v645, %v1597
  %v1639 = vmul.f32 %v646, %v1601
  %v1640 = vmul.f32 %v647, %v1597
  %v1641 = vmul.f32 %v648, %v1601
  %1642 = vst [vmem:[%s5] sm:$0xff] %v1610
  %1643 = vst [vmem:[%s5 + $0x8] sm:$0xff] %v1611
  %1644 = vst [vmem:[%s5 + $0x10] sm:$0xff] %v1612
  %1645 = vst [vmem:[%s5 + $0x18] sm:$0xff] %v1613
  %1646 = vst [vmem:[%s5 + $0x20] sm:$0xff] %v1614
  %1647 = vst [vmem:[%s5 + $0x28] sm:$0xff] %v1615
  %1648 = vst [vmem:[%s5 + $0x30] sm:$0xff] %v1616
  %1649 = vst [vmem:[%s5 + $0x38] sm:$0xff] %v1617
  %1650 = vst [vmem:[%s5 + $0x40] sm:$0xff] %v1618
  %1651 = vst [vmem:[%s5 + $0x48] sm:$0xff] %v1619
  %1652 = vst [vmem:[%s5 + $0x50] sm:$0xff] %v1620
  %1653 = vst [vmem:[%s5 + $0x58] sm:$0xff] %v1621
  %1654 = vst [vmem:[%s5 + $0x60] sm:$0xff] %v1622
  %1655 = vst [vmem:[%s5 + $0x68] sm:$0xff] %v1623
  %1656 = vst [vmem:[%s5 + $0x70] sm:$0xff] %v1624
  %1657 = vst [vmem:[%s5 + $0x78] sm:$0xff] %v1625
  %1658 = vst [vmem:[%s5 + $0x80] sm:$0xff] %v1626
  %1659 = vst [vmem:[%s5 + $0x88] sm:$0xff] %v1627
  %1660 = vst [vmem:[%s5 + $0x90] sm:$0xff] %v1628
  %1661 = vst [vmem:[%s5 + $0x98] sm:$0xff] %v1629
  %1662 = vst [vmem:[%s5 + $0xa0] sm:$0xff] %v1630
  %1663 = vst [vmem:[%s5 + $0xa8] sm:$0xff] %v1631
  %1664 = vst [vmem:[%s5 + $0xb0] sm:$0xff] %v1632
  %1665 = vst [vmem:[%s5 + $0xb8] sm:$0xff] %v1633
  %1666 = vst [vmem:[%s5 + $0xc0] sm:$0xff] %v1634
  %1667 = vst [vmem:[%s5 + $0xc8] sm:$0xff] %v1635
  %1668 = vst [vmem:[%s5 + $0xd0] sm:$0xff] %v1636
  %1669 = vst [vmem:[%s5 + $0xd8] sm:$0xff] %v1637
  %1670 = vst [vmem:[%s5 + $0xe0] sm:$0xff] %v1638
  %1671 = vst [vmem:[%s5 + $0xe8] sm:$0xff] %v1639
  %1672 = vst [vmem:[%s5 + $0xf0] sm:$0xff] %v1640
  %1673 = vst [vmem:[%s5 + $0xf8] sm:$0xff] %v1641
  // Predicated region
  $region22: #{cbam_pallas.1} parent=0 // pred_check
    _
  $region23: #{cbam_pallas.1} parent=0 // pred_check_branch
    %1675 = sbr.rel (0) target = $region25
  $region24: #{cbam_pallas.1} parent=0 // pred_region
    _
  $region25: #{cbam_pallas.1} parent=0 // pred_fallthru
    _
  // Predicated region
  $region26: #{cbam_pallas.1} parent=0 // pred_check
    _
  $region27: #{cbam_pallas.1} parent=0 // pred_check_branch
    %1677 = sbr.rel (0) target = $region29
  $region28: #{cbam_pallas.1} parent=0 // pred_region
    _
  $region29: #{cbam_pallas.1} parent=0 // pred_fallthru
    _

</llo_original>
